<compile_context>
chip_gen: v7x
topology: tpu7x:2x2x1
jax: 0.10.0
libtpu: 0.0.40
codegen_flags: <defaults>
</compile_context>

<pallas_src>
import functools

import jax
import jax.numpy as jnp
from jax.experimental import pallas as pl
from jax.experimental.pallas import tpu as pltpu


def _round_up(x: int, m: int) -> int:
    return ((x + m - 1) // m) * m


def _choose_tk(Kd: int, max_tk: int = 1024) -> int:
    """128-aligned K tile with <=127 elements of padding overall."""
    k_aligned = _round_up(Kd, 128)
    if k_aligned <= max_tk:
        return k_aligned
    # Largest 128-multiple <= max_tk that divides the 128-aligned K extent.
    for cand in range(max_tk, 127, -128):
        if k_aligned % cand == 0:
            return cand
    return 128


# ----------------------------------------------------------------------------
# Pallas kernel:  out = [relu_mask]( (A @ B) * scale + shift ) [+ residual]
# tiled over (M, N, K) with an f32 VMEM accumulator.
# ----------------------------------------------------------------------------
def _make_fused_gemm_kernel(use_relu_mask: bool, add_residual: bool):
    def kernel(a_ref, b_ref, scale_ref, shift_ref, *rest):
        rest = list(rest)
        mask_ref = rest.pop(0) if use_relu_mask else None
        res_ref = rest.pop(0) if add_residual else None
        o_ref, acc_ref = rest

        k = pl.program_id(2)

        @pl.when(k == 0)
        def _():
            acc_ref[...] = jnp.zeros_like(acc_ref)

        acc_ref[...] += jnp.dot(
            a_ref[...], b_ref[...], preferred_element_type=jnp.float32
        )

        @pl.when(k == pl.num_programs(2) - 1)
        def _():
            y = acc_ref[...] * scale_ref[...] + shift_ref[...]   # folded BN
            if use_relu_mask:
                y = jnp.where(mask_ref[...] > 0.0, jnp.maximum(y, 0.0), y)
            if add_residual:
                y = y + res_ref[...].astype(jnp.float32)
            o_ref[...] = y.astype(o_ref.dtype)

    return kernel


def fused_conv_gemm(a, b, scale, shift, *, relu_mask=None, residual=None,
                    tm=512, tn=256, max_tk=1024,
                    compute_dtype=jnp.bfloat16, out_dtype=jnp.float32):
    """Fused GEMM + folded BN + optional per-channel ReLU + optional residual.

    a: (M, Kd) im2col patches, b: (Kd, Cout) filter matrix,
    scale/shift: (Cout,) folded BN, relu_mask: (Cout,) 1.0 -> apply ReLU,
    residual: (M, Cout) added after BN (no ReLU on top, as in the module).
    Returns (M, Cout) in out_dtype.
    """
    M, Kd = a.shape
    Kd2, Cout = b.shape
    assert Kd == Kd2

    # ---- tile sizing ------------------------------------------------------
    # N tile: lane-dense (>=128); 256 feeds the full 256-wide MXU on v6e/v7x.
    tn_eff = min(tn, _round_up(Cout, 128))
    n_pad = _round_up(Cout, tn_eff)
    # M tile: large rows, but guarantee >= 2 parallel (M x N) blocks so both
    # v7x TensorCores get work on small-M layers.
    tm_eff = min(tm, _round_up(M, 8))
    if (_round_up(M, tm_eff) // tm_eff) * (n_pad // tn_eff) < 2 and M > 8:
        tm_eff = min(tm_eff, _round_up((M + 1) // 2, 8))
    m_pad = _round_up(M, tm_eff)
    # K tile: 128-aligned, never over-padded to a big tk multiple.
    tk_eff = _choose_tk(Kd, max_tk)
    k_pad = _round_up(Kd, tk_eff)

    grid = (m_pad // tm_eff, n_pad // tn_eff, k_pad // tk_eff)

    # ---- pad & cast operands (skip the pad op when already aligned) -------
    def _pad2(x, rows, cols):
        return x if (rows == 0 and cols == 0) else jnp.pad(x, ((0, rows), (0, cols)))

    a_p = _pad2(a.astype(compute_dtype), m_pad - M, k_pad - Kd)
    b_p = _pad2(b.astype(compute_dtype), k_pad - Kd, n_pad - Cout)
    scale_p = jnp.pad(scale.astype(jnp.float32), (0, n_pad - Cout)).reshape(1, n_pad)
    shift_p = jnp.pad(shift.astype(jnp.float32), (0, n_pad - Cout)).reshape(1, n_pad)

    in_specs = [
        pl.BlockSpec((tm_eff, tk_eff), lambda i, j, kk: (i, kk)),
        pl.BlockSpec((tk_eff, tn_eff), lambda i, j, kk: (kk, j)),
        pl.BlockSpec((1, tn_eff), lambda i, j, kk: (0, j)),
        pl.BlockSpec((1, tn_eff), lambda i, j, kk: (0, j)),
    ]
    args = [a_p, b_p, scale_p, shift_p]

    if relu_mask is not None:
        mask_p = jnp.pad(relu_mask.astype(jnp.float32),
                         (0, n_pad - Cout)).reshape(1, n_pad)
        in_specs.append(pl.BlockSpec((1, tn_eff), lambda i, j, kk: (0, j)))
        args.append(mask_p)

    if residual is not None:
        # Residual stream stays in the (narrow) compute dtype; the epilogue
        # upcasts to f32 before the add.
        res_p = _pad2(residual.astype(compute_dtype), m_pad - M, n_pad - Cout)
        in_specs.append(pl.BlockSpec((tm_eff, tn_eff), lambda i, j, kk: (i, j)))
        args.append(res_p)

    itemsize = jnp.dtype(compute_dtype).itemsize
    bytes_accessed = (
        m_pad * k_pad * itemsize * (n_pad // tn_eff)        # A re-read per j
        + k_pad * n_pad * itemsize
        + m_pad * n_pad * jnp.dtype(out_dtype).itemsize
        + (m_pad * n_pad * itemsize if residual is not None else 0)
    )
    cost = pl.CostEstimate(
        flops=2 * m_pad * k_pad * n_pad,
        transcendentals=0,
        bytes_accessed=bytes_accessed,
    )

    out = pl.pallas_call(
        _make_fused_gemm_kernel(relu_mask is not None, residual is not None),
        out_shape=jax.ShapeDtypeStruct((m_pad, n_pad), out_dtype),
        grid=grid,
        in_specs=in_specs,
        out_specs=pl.BlockSpec((tm_eff, tn_eff), lambda i, j, kk: (i, j)),
        scratch_shapes=[pltpu.VMEM((tm_eff, tn_eff), jnp.float32)],
        compiler_params=pltpu.CompilerParams(
            dimension_semantics=("parallel", "parallel", "arbitrary"),
            vmem_limit_bytes=32 * 1024 * 1024,
        ),
        cost_estimate=cost,
    )(*args)

    return out[:M, :Cout]


# ----------------------------------------------------------------------------
# Plain-JAX glue: im2col patch extraction, weight reshaping, BN folding
# ----------------------------------------------------------------------------
def im2col(x_nhwc, k, stride, pad):
    """Patch matrix in the dtype of x_nhwc (cast to bf16 BEFORE calling this
    so the 9x-amplified matrix is built/stored narrow)."""
    N, H, W, C = x_nhwc.shape
    xp = jnp.pad(x_nhwc, ((0, 0), (pad, pad), (pad, pad), (0, 0)))
    Ho = (H + 2 * pad - k) // stride + 1
    Wo = (W + 2 * pad - k) // stride + 1
    cols = []
    for dy in range(k):
        for dx in range(k):
            cols.append(xp[:, dy:dy + stride * Ho:stride, dx:dx + stride * Wo:stride, :])
    col = jnp.stack(cols, axis=3)                     # (N, Ho, Wo, k*k, C)
    return col.reshape(N * Ho * Wo, k * k * C), Ho, Wo


def weight_to_gemm(w_oihw):
    Cout, Cin, Kh, Kw = w_oihw.shape
    return jnp.transpose(w_oihw, (2, 3, 1, 0)).reshape(Kh * Kw * Cin, Cout)


def fold_bn(bn, eps=1e-5):
    gamma, beta, mean, var = bn
    scale = gamma / jnp.sqrt(var + eps)
    shift = beta - mean * scale
    return scale, shift


def basic_block_forward(x_nchw, params, *, kernel_size, stride, padding,
                        downsample, compute_dtype=jnp.bfloat16):
    N, Cin, H, W = x_nchw.shape
    k = kernel_size
    Cout = params["w1"].shape[0]

    # NHWC internally; cast ONCE to the MXU compute dtype before im2col so the
    # patch matrices / intermediate activations stay narrow in HBM.
    # TODO(synk): keep NHWC across chained blocks to drop the boundary
    #             transposes when building a full ResNet.
    x_nhwc = jnp.transpose(x_nchw, (0, 2, 3, 1)).astype(compute_dtype)

    # --- stage 1: conv1(+bn1+relu) fused with the downsample conv(+bn); they
    #     share the same im2col matrix (same kernel/stride/padding). ---------
    a1, Ho, Wo = im2col(x_nhwc, k, stride, padding)
    s1, t1 = fold_bn(params["bn1"])
    b1 = weight_to_gemm(params["w1"])

    if downsample:
        sd, td = fold_bn(params["bn_ds"])
        bd = weight_to_gemm(params["w_ds"])
        b_cat = jnp.concatenate([b1, bd], axis=1)             # (Kd, 2*Cout)
        s_cat = jnp.concatenate([s1, sd])
        t_cat = jnp.concatenate([t1, td])
        relu_mask = jnp.concatenate(
            [jnp.ones((Cout,), jnp.float32), jnp.zeros((Cout,), jnp.float32)])
        # Stage-1 output stays in compute_dtype (bf16) -> halves y1 writeback,
        # the stage-2 residual read, and the stage-2 im2col matrix.
        y = fused_conv_gemm(a1, b_cat, s_cat, t_cat, relu_mask=relu_mask,
                            compute_dtype=compute_dtype,
                            out_dtype=compute_dtype)
        y1, res = y[:, :Cout], y[:, Cout:]
    else:
        # Identity shortcut requires shape-preserving main path.
        assert stride == 1 and Cin == Cout, (
            "downsample=False requires stride==1 and in_channels==out_channels")
        relu_mask = jnp.ones((Cout,), jnp.float32)
        y1 = fused_conv_gemm(a1, b1, s1, t1, relu_mask=relu_mask,
                             compute_dtype=compute_dtype,
                             out_dtype=compute_dtype)
        res = x_nhwc.reshape(N * H * W, Cin)

    y1_nhwc = y1.reshape(N, Ho, Wo, Cout)

    # --- stage 2: conv2 (stride 1) + bn2 + residual add (no final ReLU,
    #     matching the reference PyTorch module). ---------------------------
    a2, Ho2, Wo2 = im2col(y1_nhwc, k, 1, padding)
    s2, t2 = fold_bn(params["bn2"])
    y2 = fused_conv_gemm(a2, weight_to_gemm(params["w2"]), s2, t2,
                         residual=res, compute_dtype=compute_dtype,
                         out_dtype=jnp.float32)
    out_nhwc = y2.reshape(N, Ho2, Wo2, Cout)
    return jnp.transpose(out_nhwc, (0, 3, 1, 2))      # back to NCHW


# ----------------------------------------------------------------------------
# Pure-JAX reference (NCHW, lax convs, f32) used to verify the Pallas path
# ----------------------------------------------------------------------------
def reference_forward(x, params, *, stride, padding, downsample, eps=1e-5):
    def conv(x, w, s):
        return jax.lax.conv_general_dilated(
            x, w, window_strides=(s, s), padding=[(padding, padding)] * 2,
            dimension_numbers=("NCHW", "OIHW", "NCHW"))

    def bn(x, p):
        g, b, m, v = (t[None, :, None, None] for t in p)
        return (x - m) / jnp.sqrt(v + eps) * g + b

    y = jnp.maximum(bn(conv(x, params["w1"], stride), params["bn1"]), 0.0)
    y = bn(conv(y, params["w2"], 1), params["bn2"])
    r = bn(conv(x, params["w_ds"], stride), params["bn_ds"]) if downsample else x
    return r + y


# ----------------------------------------------------------------------------
if __name__ == "__main__":
    # BasicBlock(in_channels=4, out_channels=8, kernel_size=3, stride=2,
    #            padding=1, downsample=True) on x of shape (2, 4, 16, 16)
    N, Cin, H, W = 2, 4, 16, 16
    Cout, K, STRIDE, PAD = 8, 3, 2, 1
    DOWNSAMPLE = True

    key = jax.random.PRNGKey(0)
    ks = jax.random.split(key, 12)

    def bn_params(k0, k1, k2, k3, c):
        gamma = jax.random.uniform(k0, (c,), jnp.float32, 0.5, 1.5)
        beta = jax.random.normal(k1, (c,), jnp.float32) * 0.1
        mean = jax.random.normal(k2, (c,), jnp.float32) * 0.1
        var = jax.random.uniform(k3, (c,), jnp.float32, 0.5, 1.5)
        return (gamma, beta, mean, var)

    params = {
        "w1": jax.random.normal(ks[0], (Cout, Cin, K, K), jnp.float32) * 0.1,
        "w2": jax.random.normal(ks[1], (Cout, Cout, K, K), jnp.float32) * 0.1,
        "w_ds": jax.random.normal(ks[2], (Cout, Cin, K, K), jnp.float32) * 0.1,
        "bn1": bn_params(ks[3], ks[4], ks[5], ks[6], Cout),
        "bn2": bn_params(ks[7], ks[8], ks[9], ks[10], Cout),
        "bn_ds": bn_params(ks[4], ks[7], ks[2], ks[11], Cout),
    }

    x = jax.random.normal(ks[11], (N, Cin, H, W), jnp.float32)

    ref = reference_forward(x, params, stride=STRIDE, padding=PAD,
                            downsample=DOWNSAMPLE)

    # f32 compute path: same math as the reference -> tight tolerance.
    fwd_f32 = jax.jit(functools.partial(
        basic_block_forward, kernel_size=K, stride=STRIDE, padding=PAD,
        downsample=DOWNSAMPLE, compute_dtype=jnp.float32))
    out_f32 = jax.block_until_ready(fwd_f32(x, params))
    assert out_f32.shape == ref.shape == (N, Cout, H // STRIDE, W // STRIDE)
    assert jnp.allclose(out_f32, ref, atol=1e-4, rtol=1e-4), "f32 mismatch vs reference"

    # bf16 compute path (MXU-native production configuration): loose tol.
    fwd_bf16 = jax.jit(functools.partial(
        basic_block_forward, kernel_size=K, stride=STRIDE, padding=PAD,
        downsample=DOWNSAMPLE, compute_dtype=jnp.bfloat16))
    out_bf16 = jax.block_until_ready(fwd_bf16(x, params))
    assert out_bf16.shape == ref.shape
    rel_l2 = jnp.linalg.norm(out_bf16 - ref) / jnp.linalg.norm(ref)
    assert float(rel_l2) < 2e-2, f"bf16 relative L2 error too large: {rel_l2}"
    assert float(jnp.max(jnp.abs(out_bf16 - ref))) < 1e-1, "bf16 max-abs error too large"

    print("KERNEL_OK")
</pallas_src>

<mosaic_0001>
module attributes {stable_mosaic.version = 11 : i64} {
  func.func @kernel(%arg0: i32, %arg1: i32, %arg2: i32, %arg3: memref<64x128xf32, #tpu.memory_space<vmem>>, %arg4: memref<128x128xf32, #tpu.memory_space<vmem>>, %arg5: memref<1x128xf32, #tpu.memory_space<vmem>>, %arg6: memref<1x128xf32, #tpu.memory_space<vmem>>, %arg7: memref<1x128xf32, #tpu.memory_space<vmem>>, %arg8: memref<64x128xf32, #tpu.memory_space<vmem>>, %arg9: memref<64x128xf32, #tpu.memory_space<vmem>>) attributes {dimension_semantics = [#tpu.dimension_semantics<parallel>, #tpu.dimension_semantics<parallel>, #tpu.dimension_semantics<arbitrary>], iteration_bounds = array<i64: 2, 1, 1>, scalar_prefetch = 0 : i64, scratch_operands = 1 : i64, tpu.core_type = #tpu.core_type<tc>, window_params = [{transform_indices = @transform_0, window_bounds = array<i64: 64, 128>}, {transform_indices = @transform_1, window_bounds = array<i64: 128, 128>}, {transform_indices = @transform_2, window_bounds = array<i64: 1, 128>}, {transform_indices = @transform_3, window_bounds = array<i64: 1, 128>}, {transform_indices = @transform_4, window_bounds = array<i64: 1, 128>}, {transform_indices = @transform_5, window_bounds = array<i64: 64, 128>}]} {
    %c0_i32 = arith.constant 0 : i32
    %0 = arith.cmpi eq, %arg2, %c0_i32 : i32
    %1 = arith.extui %0 : i1 to i32
    %c0_i32_0 = arith.constant 0 : i32
    %2 = arith.cmpi ne, %1, %c0_i32_0 : i32
    scf.if %2 {
      %cst_10 = arith.constant 0.000000e+00 : f32
      %12 = vector.broadcast %cst_10 : f32 to vector<64x128xf32>
      %c0_11 = arith.constant 0 : index
      %c0_12 = arith.constant 0 : index
      %13 = vector.load %arg9[%c0_11, %c0_12] : memref<64x128xf32, #tpu.memory_space<vmem>>, vector<64x128xf32>
      tpu.vector_store %arg9[%c0_11, %c0_12], %12 {strides = array<i32>} : memref<64x128xf32, #tpu.memory_space<vmem>>, vector<64x128xf32>,
    } else {
    }
    %c0 = arith.constant 0 : index
    %c0_1 = arith.constant 0 : index
    %3 = vector.load %arg9[%c0, %c0_1] : memref<64x128xf32, #tpu.memory_space<vmem>>, vector<64x128xf32>
    %c0_2 = arith.constant 0 : index
    %c0_3 = arith.constant 0 : index
    %4 = vector.load %arg3[%c0_2, %c0_3] : memref<64x128xf32, #tpu.memory_space<vmem>>, vector<64x128xf32>
    %c0_4 = arith.constant 0 : index
    %c0_5 = arith.constant 0 : index
    %5 = vector.load %arg4[%c0_4, %c0_5] : memref<128x128xf32, #tpu.memory_space<vmem>>, vector<128x128xf32>
    %cst = arith.constant dense<0.000000e+00> : vector<64x128xf32>
    %6 = tpu.matmul %4, %5, %cst {dimension_numbers = #tpu.dot_dimension_numbers<[1], [0], [0], [1], [0, 0, 1, 1], [], []>} : vector<64x128xf32>, vector<128x128xf32>, vector<64x128xf32> -> vector<64x128xf32>
    %7 = arith.addf %3, %6 : vector<64x128xf32>
    %c0_6 = arith.constant 0 : index
    %c0_7 = arith.constant 0 : index
    %8 = vector.load %arg9[%c0_6, %c0_7] : memref<64x128xf32, #tpu.memory_space<vmem>>, vector<64x128xf32>
    tpu.vector_store %arg9[%c0_6, %c0_7], %7 {strides = array<i32>} : memref<64x128xf32, #tpu.memory_space<vmem>>, vector<64x128xf32>,
    %c0_i32_8 = arith.constant 0 : i32
    %9 = arith.cmpi eq, %arg2, %c0_i32_8 : i32
    %10 = arith.extui %9 : i1 to i32
    %c0_i32_9 = arith.constant 0 : i32
    %11 = arith.cmpi ne, %10, %c0_i32_9 : i32
    scf.if %11 {
      %c0_10 = arith.constant 0 : index
      %c0_11 = arith.constant 0 : index
      %12 = vector.load %arg9[%c0_10, %c0_11] : memref<64x128xf32, #tpu.memory_space<vmem>>, vector<64x128xf32>
      %c0_12 = arith.constant 0 : index
      %c0_13 = arith.constant 0 : index
      %13 = vector.load %arg5[%c0_12, %c0_13] : memref<1x128xf32, #tpu.memory_space<vmem>>, vector<1x128xf32>
      %14 = vector.broadcast %13 : vector<1x128xf32> to vector<64x128xf32>
      %15 = arith.mulf %12, %14 : vector<64x128xf32>
      %c0_14 = arith.constant 0 : index
      %c0_15 = arith.constant 0 : index
      %16 = vector.load %arg6[%c0_14, %c0_15] : memref<1x128xf32, #tpu.memory_space<vmem>>, vector<1x128xf32>
      %17 = vector.broadcast %16 : vector<1x128xf32> to vector<64x128xf32>
      %18 = arith.addf %15, %17 : vector<64x128xf32>
      %c0_16 = arith.constant 0 : index
      %c0_17 = arith.constant 0 : index
      %19 = vector.load %arg7[%c0_16, %c0_17] : memref<1x128xf32, #tpu.memory_space<vmem>>, vector<1x128xf32>
      %cst_18 = arith.constant 0.000000e+00 : f32
      %20 = vector.broadcast %cst_18 : f32 to vector<1x128xf32>
      %21 = arith.cmpf ogt, %19, %20 : vector<1x128xf32>
      %cst_19 = arith.constant 0.000000e+00 : f32
      %22 = vector.broadcast %cst_19 : f32 to vector<64x128xf32>
      %23 = arith.maximumf %18, %22 : vector<64x128xf32>
      %24 = vector.shape_cast %21 : vector<1x128xi1> to vector<1x128xi1>
      %25 = vector.broadcast %24 : vector<1x128xi1> to vector<64x128xi1>
      %26 = arith.select %25, %23, %18 : vector<64x128xi1>, vector<64x128xf32>
      %c0_20 = arith.constant 0 : index
      %c0_21 = arith.constant 0 : index
      %27 = vector.load %arg8[%c0_20, %c0_21] : memref<64x128xf32, #tpu.memory_space<vmem>>, vector<64x128xf32>
      tpu.vector_store %arg8[%c0_20, %c0_21], %26 {strides = array<i32>} : memref<64x128xf32, #tpu.memory_space<vmem>>, vector<64x128xf32>,
    } else {
    }
    return
  }
  func.func @transform_0(%arg0: i32, %arg1: i32, %arg2: i32) -> (i32, i32) {
    %c0_i32 = arith.constant 0 : i32
    return %arg0, %arg2 : i32, i32
  }
  func.func @transform_1(%arg0: i32, %arg1: i32, %arg2: i32) -> (i32, i32) {
    %c0_i32 = arith.constant 0 : i32
    return %arg2, %arg1 : i32, i32
  }
  func.func @transform_2(%arg0: i32, %arg1: i32, %arg2: i32) -> (i32, i32) {
    %c0_i32 = arith.constant 0 : i32
    %c0_i32_0 = arith.constant 0 : i32
    return %c0_i32, %arg1 : i32, i32
  }
  func.func @transform_3(%arg0: i32, %arg1: i32, %arg2: i32) -> (i32, i32) {
    %c0_i32 = arith.constant 0 : i32
    %c0_i32_0 = arith.constant 0 : i32
    return %c0_i32, %arg1 : i32, i32
  }
  func.func @transform_4(%arg0: i32, %arg1: i32, %arg2: i32) -> (i32, i32) {
    %c0_i32 = arith.constant 0 : i32
    %c0_i32_0 = arith.constant 0 : i32
    return %c0_i32, %arg1 : i32, i32
  }
  func.func @transform_5(%arg0: i32, %arg1: i32, %arg2: i32) -> (i32, i32) {
    %c0_i32 = arith.constant 0 : i32
    return %arg0, %arg1 : i32, i32
  }
}

module attributes {stable_mosaic.version = 11 : i64} {
  func.func @kernel(%arg0: i32, %arg1: i32, %arg2: i32, %arg3: memref<64x128xf32, #tpu.memory_space<vmem>>, %arg4: memref<128x128xf32, #tpu.memory_space<vmem>>, %arg5: memref<1x128xf32, #tpu.memory_space<vmem>>, %arg6: memref<1x128xf32, #tpu.memory_space<vmem>>, %arg7: memref<64x128xf32, #tpu.memory_space<vmem>>, %arg8: memref<64x128xf32, #tpu.memory_space<vmem>>, %arg9: memref<64x128xf32, #tpu.memory_space<vmem>>) attributes {dimension_semantics = [#tpu.dimension_semantics<parallel>, #tpu.dimension_semantics<parallel>, #tpu.dimension_semantics<arbitrary>], iteration_bounds = array<i64: 2, 1, 1>, scalar_prefetch = 0 : i64, scratch_operands = 1 : i64, tpu.core_type = #tpu.core_type<tc>, window_params = [{transform_indices = @transform_0, window_bounds = array<i64: 64, 128>}, {transform_indices = @transform_1, window_bounds = array<i64: 128, 128>}, {transform_indices = @transform_2, window_bounds = array<i64: 1, 128>}, {transform_indices = @transform_3, window_bounds = array<i64: 1, 128>}, {transform_indices = @transform_4, window_bounds = array<i64: 64, 128>}, {transform_indices = @transform_5, window_bounds = array<i64: 64, 128>}]} {
    %c0_i32 = arith.constant 0 : i32
    %0 = arith.cmpi eq, %arg2, %c0_i32 : i32
    %1 = arith.extui %0 : i1 to i32
    %c0_i32_0 = arith.constant 0 : i32
    %2 = arith.cmpi ne, %1, %c0_i32_0 : i32
    scf.if %2 {
      %cst_10 = arith.constant 0.000000e+00 : f32
      %12 = vector.broadcast %cst_10 : f32 to vector<64x128xf32>
      %c0_11 = arith.constant 0 : index
      %c0_12 = arith.constant 0 : index
      %13 = vector.load %arg9[%c0_11, %c0_12] : memref<64x128xf32, #tpu.memory_space<vmem>>, vector<64x128xf32>
      tpu.vector_store %arg9[%c0_11, %c0_12], %12 {strides = array<i32>} : memref<64x128xf32, #tpu.memory_space<vmem>>, vector<64x128xf32>,
    } else {
    }
    %c0 = arith.constant 0 : index
    %c0_1 = arith.constant 0 : index
    %3 = vector.load %arg9[%c0, %c0_1] : memref<64x128xf32, #tpu.memory_space<vmem>>, vector<64x128xf32>
    %c0_2 = arith.constant 0 : index
    %c0_3 = arith.constant 0 : index
    %4 = vector.load %arg3[%c0_2, %c0_3] : memref<64x128xf32, #tpu.memory_space<vmem>>, vector<64x128xf32>
    %c0_4 = arith.constant 0 : index
    %c0_5 = arith.constant 0 : index
    %5 = vector.load %arg4[%c0_4, %c0_5] : memref<128x128xf32, #tpu.memory_space<vmem>>, vector<128x128xf32>
    %cst = arith.constant dense<0.000000e+00> : vector<64x128xf32>
    %6 = tpu.matmul %4, %5, %cst {dimension_numbers = #tpu.dot_dimension_numbers<[1], [0], [0], [1], [0, 0, 1, 1], [], []>} : vector<64x128xf32>, vector<128x128xf32>, vector<64x128xf32> -> vector<64x128xf32>
    %7 = arith.addf %3, %6 : vector<64x128xf32>
    %c0_6 = arith.constant 0 : index
    %c0_7 = arith.constant 0 : index
    %8 = vector.load %arg9[%c0_6, %c0_7] : memref<64x128xf32, #tpu.memory_space<vmem>>, vector<64x128xf32>
    tpu.vector_store %arg9[%c0_6, %c0_7], %7 {strides = array<i32>} : memref<64x128xf32, #tpu.memory_space<vmem>>, vector<64x128xf32>,
    %c0_i32_8 = arith.constant 0 : i32
    %9 = arith.cmpi eq, %arg2, %c0_i32_8 : i32
    %10 = arith.extui %9 : i1 to i32
    %c0_i32_9 = arith.constant 0 : i32
    %11 = arith.cmpi ne, %10, %c0_i32_9 : i32
    scf.if %11 {
      %c0_10 = arith.constant 0 : index
      %c0_11 = arith.constant 0 : index
      %12 = vector.load %arg9[%c0_10, %c0_11] : memref<64x128xf32, #tpu.memory_space<vmem>>, vector<64x128xf32>
      %c0_12 = arith.constant 0 : index
      %c0_13 = arith.constant 0 : index
      %13 = vector.load %arg5[%c0_12, %c0_13] : memref<1x128xf32, #tpu.memory_space<vmem>>, vector<1x128xf32>
      %14 = vector.broadcast %13 : vector<1x128xf32> to vector<64x128xf32>
      %15 = arith.mulf %12, %14 : vector<64x128xf32>
      %c0_14 = arith.constant 0 : index
      %c0_15 = arith.constant 0 : index
      %16 = vector.load %arg6[%c0_14, %c0_15] : memref<1x128xf32, #tpu.memory_space<vmem>>, vector<1x128xf32>
      %17 = vector.broadcast %16 : vector<1x128xf32> to vector<64x128xf32>
      %18 = arith.addf %15, %17 : vector<64x128xf32>
      %c0_16 = arith.constant 0 : index
      %c0_17 = arith.constant 0 : index
      %19 = vector.load %arg7[%c0_16, %c0_17] : memref<64x128xf32, #tpu.memory_space<vmem>>, vector<64x128xf32>
      %20 = arith.addf %18, %19 : vector<64x128xf32>
      %c0_18 = arith.constant 0 : index
      %c0_19 = arith.constant 0 : index
      %21 = vector.load %arg8[%c0_18, %c0_19] : memref<64x128xf32, #tpu.memory_space<vmem>>, vector<64x128xf32>
      tpu.vector_store %arg8[%c0_18, %c0_19], %20 {strides = array<i32>} : memref<64x128xf32, #tpu.memory_space<vmem>>, vector<64x128xf32>,
    } else {
    }
    return
  }
  func.func @transform_0(%arg0: i32, %arg1: i32, %arg2: i32) -> (i32, i32) {
    %c0_i32 = arith.constant 0 : i32
    return %arg0, %arg2 : i32, i32
  }
  func.func @transform_1(%arg0: i32, %arg1: i32, %arg2: i32) -> (i32, i32) {
    %c0_i32 = arith.constant 0 : i32
    return %arg2, %arg1 : i32, i32
  }
  func.func @transform_2(%arg0: i32, %arg1: i32, %arg2: i32) -> (i32, i32) {
    %c0_i32 = arith.constant 0 : i32
    %c0_i32_0 = arith.constant 0 : i32
    return %c0_i32, %arg1 : i32, i32
  }
  func.func @transform_3(%arg0: i32, %arg1: i32, %arg2: i32) -> (i32, i32) {
    %c0_i32 = arith.constant 0 : i32
    %c0_i32_0 = arith.constant 0 : i32
    return %c0_i32, %arg1 : i32, i32
  }
  func.func @transform_4(%arg0: i32, %arg1: i32, %arg2: i32) -> (i32, i32) {
    %c0_i32 = arith.constant 0 : i32
    return %arg0, %arg1 : i32, i32
  }
  func.func @transform_5(%arg0: i32, %arg1: i32, %arg2: i32) -> (i32, i32) {
    %c0_i32 = arith.constant 0 : i32
    return %arg0, %arg1 : i32, i32
  }
}

</mosaic_0001>

<llo_original>
// kernel: basic_block_forward.2
$region0: #{basic_block_forward.2}
  #allocation0 [shape = 'u32[]', space=smem, size = 0x4, offset = 0x4, fixed_abs, tag = 'smem constant byte address 0x4 - core index']
  #allocation1 [shape = 'u32[144,128]{1,0:T(1,128)}', space=vmem, size = 0x12000, scoped, tag = 'internal scratch']
  #allocation2 [shape = 'f32[64,128]{1,0:T(8,128)}', space=vmem, size = 0x8000, scoped, tag = 'scratch operand']
  %s0 = inlined_call_operand.vmem [shape: f32[128,128], index: 0, kind: input, shape index: {}]
  %s1 = inlined_call_operand.vmem [shape: f32[128,128], index: 1, kind: input, shape index: {}]
  %s2 = inlined_call_operand.vmem [shape: f32[1,128], index: 2, kind: input, shape index: {}]
  %s3 = inlined_call_operand.vmem [shape: f32[1,128], index: 3, kind: input, shape index: {}]
  %s4 = inlined_call_operand.vmem [shape: f32[1,128], index: 4, kind: input, shape index: {}]
  %s5 = inlined_call_operand.vmem [shape: f32[128,128], index: 5, kind: output, shape index: {}]
  %s6 = sld [smem:[#allocation0]]
  $region61: #{basic_block_forward.2} parent=0
    _
  %s8 = ssub.s32 1, %s6
  %s9 = scalar_select 0, %s8, %s6
  loop: start=0, step=1, limit=4
  $region2: #{basic_block_forward.2} parent=0 // loop_pre_header
    _
  $region3: #{basic_block_forward.2} parent=0 // loop_header
    %s11 = sphi 0, %s15
    %p12 = scmp.ge.s32.totalorder %s11, 4
    %s18 = sphi 0, %s37
    %s19 = sphi 0, %s33
    %s20 = sphi 0, %s29
    %s21 = sphi 0, %s18
    %s22 = sphi 0, %s19
    %s23 = sphi 0, %s20
    %s24 = sphi 0, %s21
    %s25 = sphi 0, %s22
    %s26 = sphi 0, %s23
    %s42 = sphi 0, %s44
    %s45 = sphi 0, %s42
    %s46 = sphi 0, %s45
    %s62 = sphi 0, %s46
    %s70 = sphi 0, %s72
    %s73 = sphi 0, %s70
    %s74 = sphi 0, %s73
    %s90 = sphi 0, %s74
    %s96 = sphi 0, %s98
    %s99 = sphi 0, %s96
    %s100 = sphi 0, %s99
    %s116 = sphi 0, %s100
    %s122 = sphi 0, %s124
    %s125 = sphi 0, %s122
    %s126 = sphi 0, %s125
    %s142 = sphi 0, %s126
    %s148 = sphi 0, %s150
    %s151 = sphi 0, %s148
    %s152 = sphi 0, %s151
    %s168 = sphi 0, %s152
    %s176 = sphi 0, %s178
    %s179 = sphi 0, %s176
    %s180 = sphi 0, %s179
    %s196 = sphi 0, %s180
  $region4: #{basic_block_forward.2} parent=0 // loop_header_branch
    %14 = sbr.rel (%p12) target = $region8
  $region5: #{basic_block_forward.2} parent=0 // loop_body
    %s16 = ssub.s32 %s11, 1
    %s17 = ssub.s32 %s11, 2
    %s27 = sadd.s32 1, %s20
    %p28 = scmp.ge.s32.totalorder %s27, 1
    %s29 = scalar_select %p28, 0, %s27
    %s30 = sadd.s32 1, %s19
    %s31 = scalar_select %p28, %s30, %s19
    %p32 = scmp.ge.s32.totalorder %s31, 1
    %s33 = scalar_select %p32, 0, %s31
    %s34 = sadd.s32 1, %s18
    %s35 = scalar_select %p32, %s34, %s18
    %p36 = scmp.ge.s32.totalorder %s35, 2
    %s37 = scalar_select %p36, 0, %s35
    %s38 = ssub.s32 %s18, %s37
    %s39 = ssub.s32 %s20, %s29
    %s40 = sor.u32 %s38, %s39
    %p41 = scmp.eq.s32.totalorder %s40, 0
    %s43 = sadd.s32 %s42, 1
    %s44 = scalar_select %p41, %s42, %s43
    %p47 = pneg %p41
    %p48 = scmp.eq.s32.totalorder %s11, 1
    %p49 = por %p47, %p48
    %p50 = scmp.ne.s32.totalorder %s42, %s45
    %p51 = scmp.eq.s32.totalorder %s11, 0
    %p52 = por %p50, %p51
    %p53 = scmp.ne.s32.totalorder %s42, %s45
    %p54 = scmp.eq.s32.totalorder %s16, 1
    %p55 = por %p53, %p54
    %p56 = scmp.ne.s32.totalorder %s45, %s46
    %p57 = scmp.eq.s32.totalorder %s16, 0
    %p58 = por %p56, %p57
    %p59 = scmp.ne.s32.totalorder %s45, %s46
    %p60 = scmp.eq.s32.totalorder %s17, 1
    %p61 = por %p59, %p60
    %p63 = scmp.ne.s32.totalorder %s46, %s62
    %p64 = scmp.eq.s32.totalorder %s17, 0
    %p65 = por %p63, %p64
    %s66 = ssub.s32 %s20, %s29
    %s67 = ssub.s32 %s19, %s33
    %s68 = sor.u32 %s66, %s67
    %p69 = scmp.eq.s32.totalorder %s68, 0
    %s71 = sadd.s32 %s70, 1
    %s72 = scalar_select %p69, %s70, %s71
    %p75 = pneg %p69
    %p76 = scmp.eq.s32.totalorder %s11, 1
    %p77 = por %p75, %p76
    %p78 = scmp.ne.s32.totalorder %s70, %s73
    %p79 = scmp.eq.s32.totalorder %s11, 0
    %p80 = por %p78, %p79
    %p81 = scmp.ne.s32.totalorder %s70, %s73
    %p82 = scmp.eq.s32.totalorder %s16, 1
    %p83 = por %p81, %p82
    %p84 = scmp.ne.s32.totalorder %s73, %s74
    %p85 = scmp.eq.s32.totalorder %s16, 0
    %p86 = por %p84, %p85
    %p87 = scmp.ne.s32.totalorder %s73, %s74
    %p88 = scmp.eq.s32.totalorder %s17, 1
    %p89 = por %p87, %p88
    %p91 = scmp.ne.s32.totalorder %s74, %s90
    %p92 = scmp.eq.s32.totalorder %s17, 0
    %p93 = por %p91, %p92
    %s94 = ssub.s32 %s19, %s33
    %p95 = scmp.eq.s32.totalorder %s94, 0
    %s97 = sadd.s32 %s96, 1
    %s98 = scalar_select %p95, %s96, %s97
    %p101 = pneg %p95
    %p102 = scmp.eq.s32.totalorder %s11, 1
    %p103 = por %p101, %p102
    %p104 = scmp.ne.s32.totalorder %s96, %s99
    %p105 = scmp.eq.s32.totalorder %s11, 0
    %p106 = por %p104, %p105
    %p107 = scmp.ne.s32.totalorder %s96, %s99
    %p108 = scmp.eq.s32.totalorder %s16, 1
    %p109 = por %p107, %p108
    %p110 = scmp.ne.s32.totalorder %s99, %s100
    %p111 = scmp.eq.s32.totalorder %s16, 0
    %p112 = por %p110, %p111
    %p113 = scmp.ne.s32.totalorder %s99, %s100
    %p114 = scmp.eq.s32.totalorder %s17, 1
    %p115 = por %p113, %p114
    %p117 = scmp.ne.s32.totalorder %s100, %s116
    %p118 = scmp.eq.s32.totalorder %s17, 0
    %p119 = por %p117, %p118
    %s120 = ssub.s32 %s19, %s33
    %p121 = scmp.eq.s32.totalorder %s120, 0
    %s123 = sadd.s32 %s122, 1
    %s124 = scalar_select %p121, %s122, %s123
    %p127 = pneg %p121
    %p128 = scmp.eq.s32.totalorder %s11, 1
    %p129 = por %p127, %p128
    %p130 = scmp.ne.s32.totalorder %s122, %s125
    %p131 = scmp.eq.s32.totalorder %s11, 0
    %p132 = por %p130, %p131
    %p133 = scmp.ne.s32.totalorder %s122, %s125
    %p134 = scmp.eq.s32.totalorder %s16, 1
    %p135 = por %p133, %p134
    %p136 = scmp.ne.s32.totalorder %s125, %s126
    %p137 = scmp.eq.s32.totalorder %s16, 0
    %p138 = por %p136, %p137
    %p139 = scmp.ne.s32.totalorder %s125, %s126
    %p140 = scmp.eq.s32.totalorder %s17, 1
    %p141 = por %p139, %p140
    %p143 = scmp.ne.s32.totalorder %s126, %s142
    %p144 = scmp.eq.s32.totalorder %s17, 0
    %p145 = por %p143, %p144
    %s146 = ssub.s32 %s19, %s33
    %p147 = scmp.eq.s32.totalorder %s146, 0
    %s149 = sadd.s32 %s148, 1
    %s150 = scalar_select %p147, %s148, %s149
    %p153 = pneg %p147
    %p154 = scmp.eq.s32.totalorder %s11, 1
    %p155 = por %p153, %p154
    %p156 = scmp.ne.s32.totalorder %s148, %s151
    %p157 = scmp.eq.s32.totalorder %s11, 0
    %p158 = por %p156, %p157
    %p159 = scmp.ne.s32.totalorder %s148, %s151
    %p160 = scmp.eq.s32.totalorder %s16, 1
    %p161 = por %p159, %p160
    %p162 = scmp.ne.s32.totalorder %s151, %s152
    %p163 = scmp.eq.s32.totalorder %s16, 0
    %p164 = por %p162, %p163
    %p165 = scmp.ne.s32.totalorder %s151, %s152
    %p166 = scmp.eq.s32.totalorder %s17, 1
    %p167 = por %p165, %p166
    %p169 = scmp.ne.s32.totalorder %s152, %s168
    %p170 = scmp.eq.s32.totalorder %s17, 0
    %p171 = por %p169, %p170
    %s172 = ssub.s32 %s18, %s37
    %s173 = ssub.s32 %s19, %s33
    %s174 = sor.u32 %s172, %s173
    %p175 = scmp.eq.s32.totalorder %s174, 0
    %s177 = sadd.s32 %s176, 1
    %s178 = scalar_select %p175, %s176, %s177
    %p181 = pneg %p175
    %p182 = scmp.eq.s32.totalorder %s11, 1
    %p183 = por %p181, %p182
    %p184 = scmp.ne.s32.totalorder %s176, %s179
    %p185 = scmp.eq.s32.totalorder %s11, 0
    %p186 = por %p184, %p185
    %p187 = scmp.ne.s32.totalorder %s176, %s179
    %p188 = scmp.eq.s32.totalorder %s16, 1
    %p189 = por %p187, %p188
    %p190 = scmp.ne.s32.totalorder %s179, %s180
    %p191 = scmp.eq.s32.totalorder %s16, 0
    %p192 = por %p190, %p191
    %p193 = scmp.ne.s32.totalorder %s179, %s180
    %p194 = scmp.eq.s32.totalorder %s17, 1
    %p195 = por %p193, %p194
    %p197 = scmp.ne.s32.totalorder %s180, %s196
    %p198 = scmp.eq.s32.totalorder %s17, 0
    %p199 = por %p197, %p198
    %p200 = scmp.le.s32.totalorder 1, %s11
    %p201 = scmp.lt.s32.totalorder %s11, 3
    %p202 = pnand %p200, %p201
    %p203 = pneg %p202
    // Predicated region
    $region9: #{basic_block_forward.2} parent=5 // pred_check
      _
    $region10: #{basic_block_forward.2} parent=5 // pred_check_branch
      %205 = sbr.rel (%p202) target = $region12
    $region11: #{basic_block_forward.2} parent=5 // pred_region
      %s206 = ssub.s32 %s11, 1
      // Predicated region
      $region13: #{basic_block_forward.2} parent=11 // pred_check
        %p207 = pneg %p86
      $region14: #{basic_block_forward.2} parent=11 // pred_check_branch
        %209 = sbr.rel (%p207) target = $region16
      $region15: #{basic_block_forward.2} parent=11 // pred_region
        %s210 = smul.u32 16, %s23
        %p211 = scmp.lt.s32.totalorder %s210, 15
        %s212 = scalar_select %p211, %s210, 15
        %p213 = scmp.lt.s32.totalorder %s22, 0
        %s214 = scalar_select %p213, %s22, 0
        %s215 = sadd.s32 %s214, %s212
        %s216 = smul.addr %s215, 8
        %s217 = scalar_lea.vmem %s1, %s216
        %s218 = smul.u32 16, %s23
      $region16: #{basic_block_forward.2} parent=11 // pred_fallthru
        _
      // Predicated region
      $region17: #{basic_block_forward.2} parent=11 // pred_check
        %p219 = pneg %p112
      $region18: #{basic_block_forward.2} parent=11 // pred_check_branch
        %221 = sbr.rel (%p219) target = $region20
      $region19: #{basic_block_forward.2} parent=11 // pred_region
        %p222 = scmp.lt.s32.totalorder %s22, 0
        %s223 = scalar_select %p222, %s22, 0
        %s224 = scalar_lea.vmem %s2, %s223
      $region20: #{basic_block_forward.2} parent=11 // pred_fallthru
        _
      // Predicated region
      $region21: #{basic_block_forward.2} parent=11 // pred_check
        %p225 = pneg %p138
      $region22: #{basic_block_forward.2} parent=11 // pred_check_branch
        %227 = sbr.rel (%p225) target = $region24
      $region23: #{basic_block_forward.2} parent=11 // pred_region
        %p228 = scmp.lt.s32.totalorder %s22, 0
        %s229 = scalar_select %p228, %s22, 0
        %s230 = scalar_lea.vmem %s3, %s229
      $region24: #{basic_block_forward.2} parent=11 // pred_fallthru
        _
      // Predicated region
      $region25: #{basic_block_forward.2} parent=11 // pred_check
        %p231 = pneg %p164
      $region26: #{basic_block_forward.2} parent=11 // pred_check_branch
        %233 = sbr.rel (%p231) target = $region28
      $region27: #{basic_block_forward.2} parent=11 // pred_region
        %p234 = scmp.lt.s32.totalorder %s22, 0
        %s235 = scalar_select %p234, %s22, 0
        %s236 = scalar_lea.vmem %s4, %s235
      $region28: #{basic_block_forward.2} parent=11 // pred_fallthru
        _
    $region12: #{basic_block_forward.2} parent=5 // pred_fallthru
      _
    %p237 = scmp.lt.s32.totalorder %s11, 2
    // Predicated region
    $region29: #{basic_block_forward.2} parent=5 // pred_check
      %p238 = pneg %p237
    $region30: #{basic_block_forward.2} parent=5 // pred_check_branch
      %240 = sbr.rel (%p238) target = $region32
    $region31: #{basic_block_forward.2} parent=5 // pred_region
      // Predicated region
      $region33: #{basic_block_forward.2} parent=31 // pred_check
        %p241 = pneg %p52
      $region34: #{basic_block_forward.2} parent=31 // pred_check_branch
        %243 = sbr.rel (%p241) target = $region36
      $region35: #{basic_block_forward.2} parent=31 // pred_region
        %s244 = smul.u32 8, %s18
        %p245 = scmp.lt.s32.totalorder %s244, 15
        %s246 = scalar_select %p245, %s244, 15
        %p247 = scmp.lt.s32.totalorder %s20, 0
        %s248 = scalar_select %p247, %s20, 0
        %s249 = sadd.s32 %s248, %s246
        %s250 = smul.addr %s249, 8
        %s251 = scalar_lea.vmem %s0, %s250
        %s252 = smul.u32 8, %s18
      $region36: #{basic_block_forward.2} parent=31 // pred_fallthru
        _
    $region32: #{basic_block_forward.2} parent=5 // pred_fallthru
      _
    %p253 = scmp.le.s32.totalorder 1, %s11
    %p254 = scmp.lt.s32.totalorder %s11, 3
    %p255 = pnand %p253, %p254
    %p256 = pneg %p255
    // Predicated region
    $region37: #{basic_block_forward.2} parent=5 // pred_check
      _
    $region38: #{basic_block_forward.2} parent=5 // pred_check_branch
      %258 = sbr.rel (%p255) target = $region40
    $region39: #{basic_block_forward.2} parent=5 // pred_region
      %s259 = ssub.s32 %s11, 1
      %s260 = smul.u32 8, %s21
      %p261 = scmp.lt.s32.totalorder %s260, 15
      %s262 = scalar_select %p261, %s260, 15
      %p263 = scmp.lt.s32.totalorder %s23, 0
      %s264 = scalar_select %p263, %s23, 0
      %s265 = sadd.s32 %s264, %s262
      %s266 = smul.addr %s265, 8
      %s267 = scalar_lea.vmem %s0, %s266
      %p268 = pneg %p58
      %p269 = pneg %p55
      %s270 = smul.u32 16, %s23
      %p271 = scmp.lt.s32.totalorder %s270, 15
      %s272 = scalar_select %p271, %s270, 15
      %p273 = scmp.lt.s32.totalorder %s22, 0
      %s274 = scalar_select %p273, %s22, 0
      %s275 = sadd.s32 %s274, %s272
      %s276 = smul.addr %s275, 8
      %s277 = scalar_lea.vmem %s1, %s276
      %p278 = pneg %p86
      %p279 = pneg %p83
      %p280 = scmp.lt.s32.totalorder %s22, 0
      %s281 = scalar_select %p280, %s22, 0
      %s282 = scalar_lea.vmem %s2, %s281
      %p283 = pneg %p112
      %p284 = pneg %p109
      %p285 = scmp.lt.s32.totalorder %s22, 0
      %s286 = scalar_select %p285, %s22, 0
      %s287 = scalar_lea.vmem %s3, %s286
      %p288 = pneg %p138
      %p289 = pneg %p135
      %p290 = scmp.lt.s32.totalorder %s22, 0
      %s291 = scalar_select %p290, %s22, 0
      %s292 = scalar_lea.vmem %s4, %s291
      %p293 = pneg %p164
      %p294 = pneg %p161
      %p295 = pneg %p192
      %p296 = pneg %p189
      %s297 = smul.u32 8, %s21
      %p298 = scmp.lt.s32.totalorder %s297, 15
      %s299 = scalar_select %p298, %s297, 15
      %p300 = scmp.lt.s32.totalorder %s22, 0
      %s301 = scalar_select %p300, %s22, 0
      %s302 = sadd.s32 %s301, %s299
      %s303 = smul.addr %s302, 8
      %s304 = scalar_lea.vmem %s5, %s303
      %s305 = smul.u32 8, %s21
      %p306 = scmp.lt.s32.totalorder %s305, 15
      %s307 = scalar_select %p306, %s305, 15
      %p308 = scmp.lt.s32.totalorder %s23, 0
      %s309 = scalar_select %p308, %s23, 0
      %s310 = sadd.s32 %s309, %s307
      %s311 = smul.addr %s310, 8
      %s312 = scalar_lea.vmem %s0, %s311
      %s313 = smul.u32 8, %s21
      %s314 = smul.u32 16, %s23
      %p315 = scmp.lt.s32.totalorder %s314, 15
      %s316 = scalar_select %p315, %s314, 15
      %p317 = scmp.lt.s32.totalorder %s22, 0
      %s318 = scalar_select %p317, %s22, 0
      %s319 = sadd.s32 %s318, %s316
      %s320 = smul.addr %s319, 8
      %s321 = scalar_lea.vmem %s1, %s320
      %s322 = smul.u32 16, %s23
      %p323 = scmp.lt.s32.totalorder %s22, 0
      %s324 = scalar_select %p323, %s22, 0
      %s325 = scalar_lea.vmem %s2, %s324
      %p326 = scmp.lt.s32.totalorder %s22, 0
      %s327 = scalar_select %p326, %s22, 0
      %s328 = scalar_lea.vmem %s3, %s327
      %p329 = scmp.lt.s32.totalorder %s22, 0
      %s330 = scalar_select %p329, %s22, 0
      %s331 = scalar_lea.vmem %s4, %s330
      %s332 = smul.u32 8, %s21
      %p333 = scmp.lt.s32.totalorder %s332, 15
      %s334 = scalar_select %p333, %s332, 15
      %p335 = scmp.lt.s32.totalorder %s22, 0
      %s336 = scalar_select %p335, %s22, 0
      %s337 = sadd.s32 %s336, %s334
      %s338 = smul.addr %s337, 8
      %s339 = scalar_lea.vmem %s5, %s338
      %s340 = smul.u32 8, %s21
      %p341 = scmp.eq.s32.totalorder %s23, 0
      // Predicated region
      $region41: #{basic_block_forward.2} parent=39 // pred_check
        %p342 = pneg %p341
      $region42: #{basic_block_forward.2} parent=39 // pred_check_branch
        %344 = sbr.rel (%p342) target = $region44
      $region43: #{basic_block_forward.2} parent=39 // pred_region
        %345 = vst [vmem:[#allocation2] sm:$0xff] 0.0
        %346 = vst [vmem:[#allocation2 + $0x8] sm:$0xff] 0.0
        %347 = vst [vmem:[#allocation2 + $0x10] sm:$0xff] 0.0
        %348 = vst [vmem:[#allocation2 + $0x18] sm:$0xff] 0.0
        %349 = vst [vmem:[#allocation2 + $0x20] sm:$0xff] 0.0
        %350 = vst [vmem:[#allocation2 + $0x28] sm:$0xff] 0.0
        %351 = vst [vmem:[#allocation2 + $0x30] sm:$0xff] 0.0
        %352 = vst [vmem:[#allocation2 + $0x38] sm:$0xff] 0.0
      $region44: #{basic_block_forward.2} parent=39 // pred_fallthru
        _
      %v353 = vld [vmem:[#allocation2] sm:$0xff]
      %v354 = vld [vmem:[#allocation2 + $0x8] sm:$0xff]
      %v355 = vld [vmem:[#allocation2 + $0x10] sm:$0xff]
      %v356 = vld [vmem:[#allocation2 + $0x18] sm:$0xff]
      %v357 = vld [vmem:[#allocation2 + $0x20] sm:$0xff]
      %v358 = vld [vmem:[#allocation2 + $0x28] sm:$0xff]
      %v359 = vld [vmem:[#allocation2 + $0x30] sm:$0xff]
      %v360 = vld [vmem:[#allocation2 + $0x38] sm:$0xff]
      %v361 = vld [vmem:[%s312] sm:$0xff]
      %v362 = vld [vmem:[%s312 + $0x8] sm:$0xff]
      %v363 = vld [vmem:[%s312 + $0x10] sm:$0xff]
      %v364 = vld [vmem:[%s312 + $0x18] sm:$0xff]
      %v365 = vld [vmem:[%s312 + $0x20] sm:$0xff]
      %v366 = vld [vmem:[%s312 + $0x28] sm:$0xff]
      %v367 = vld [vmem:[%s312 + $0x30] sm:$0xff]
      %v368 = vld [vmem:[%s312 + $0x38] sm:$0xff]
      %v369 = vld [vmem:[%s321] sm:$0xff]
      %v370 = vld [vmem:[%s321 + $0x8] sm:$0xff]
      %v371 = vld [vmem:[%s321 + $0x10] sm:$0xff]
      %v372 = vld [vmem:[%s321 + $0x18] sm:$0xff]
      %v373 = vld [vmem:[%s321 + $0x20] sm:$0xff]
      %v374 = vld [vmem:[%s321 + $0x28] sm:$0xff]
      %v375 = vld [vmem:[%s321 + $0x30] sm:$0xff]
      %v376 = vld [vmem:[%s321 + $0x38] sm:$0xff]
      %v377 = vld [vmem:[%s321 + $0x40] sm:$0xff]
      %v378 = vld [vmem:[%s321 + $0x48] sm:$0xff]
      %v379 = vld [vmem:[%s321 + $0x50] sm:$0xff]
      %v380 = vld [vmem:[%s321 + $0x58] sm:$0xff]
      %v381 = vld [vmem:[%s321 + $0x60] sm:$0xff]
      %v382 = vld [vmem:[%s321 + $0x68] sm:$0xff]
      %v383 = vld [vmem:[%s321 + $0x70] sm:$0xff]
      %v384 = vld [vmem:[%s321 + $0x78] sm:$0xff]
      %385 = vmatprep.subr.mxu0 0.0
      %386 = vmatpush1.msra.mxu0 %v369
      %387 = vmatprep.subr.mxu0 0.0
      %388 = vmatpush1.msra.mxu0 %v370
      %389 = vmatprep.subr.mxu0 0.0
      %390 = vmatpush1.msra.mxu0 %v371
      %391 = vmatprep.subr.mxu0 0.0
      %392 = vmatpush1.msra.mxu0 %v372
      %393 = vmatprep.subr.mxu0 0.0
      %394 = vmatpush1.msra.mxu0 %v373
      %395 = vmatprep.subr.mxu0 0.0
      %396 = vmatpush1.msra.mxu0 %v374
      %397 = vmatprep.subr.mxu0 0.0
      %398 = vmatpush1.msra.mxu0 %v375
      %399 = vmatprep.subr.mxu0 0.0
      %400 = vmatpush1.msra.mxu0 %v376
      %401 = vmatprep.subr.mxu0 0.0
      %402 = vmatpush1.msra.mxu0 %v377
      %403 = vmatprep.subr.mxu0 0.0
      %404 = vmatpush1.msra.mxu0 %v378
      %405 = vmatprep.subr.mxu0 0.0
      %406 = vmatpush1.msra.mxu0 %v379
      %407 = vmatprep.subr.mxu0 0.0
      %408 = vmatpush1.msra.mxu0 %v380
      %409 = vmatprep.subr.mxu0 0.0
      %410 = vmatpush1.msra.mxu0 %v381
      %411 = vmatprep.subr.mxu0 0.0
      %412 = vmatpush1.msra.mxu0 %v382
      %413 = vmatprep.subr.mxu0 0.0
      %414 = vmatpush1.msra.mxu0 %v383
      %415 = vmatprep.subr.mxu0 0.0
      %416 = vmatpush1.msra.mxu0 %v384
      %417 = vmatprep.subr.mxu0 0.0
      %418 = vmatpush1.msra.mxu0 0.0
      %419 = vmatprep.subr.mxu0 0.0
      %420 = vmatpush1.msra.mxu0 0.0
      %421 = vmatprep.subr.mxu0 0.0
      %422 = vmatpush1.msra.mxu0 0.0
      %423 = vmatprep.subr.mxu0 0.0
      %424 = vmatpush1.msra.mxu0 0.0
      %425 = vmatprep.subr.mxu0 0.0
      %426 = vmatpush1.msra.mxu0 0.0
      %427 = vmatprep.subr.mxu0 0.0
      %428 = vmatpush1.msra.mxu0 0.0
      %429 = vmatprep.subr.mxu0 0.0
      %430 = vmatpush1.msra.mxu0 0.0
      %431 = vmatprep.subr.mxu0 0.0
      %432 = vmatpush1.msra.mxu0 0.0
      %433 = vmatprep.subr.mxu0 0.0
      %434 = vmatpush1.msra.mxu0 0.0
      %435 = vmatprep.subr.mxu0 0.0
      %436 = vmatpush1.msra.mxu0 0.0
      %437 = vmatprep.subr.mxu0 0.0
      %438 = vmatpush1.msra.mxu0 0.0
      %439 = vmatprep.subr.mxu0 0.0
      %440 = vmatpush1.msra.mxu0 0.0
      %441 = vmatprep.subr.mxu0 0.0
      %442 = vmatpush1.msra.mxu0 0.0
      %443 = vmatprep.subr.mxu0 0.0
      %444 = vmatpush1.msra.mxu0 0.0
      %445 = vmatprep.subr.mxu0 0.0
      %446 = vmatpush1.msra.mxu0 0.0
      %447 = vmatprep.subr.mxu0 0.0
      %448 = vmatpush1.msra.mxu0 0.0
      %449 = vmatprep.mubr.f32.mxu0 0.0
      %450 = vmatmul.mubr.f32.gmra.mrb[0].mxu0 %v361
      %v451 = vpop.f32.mrb[0].mxu0
      %v452 = vadd.f32 0.0, %v451
      %v453 = vpop.f32.mrb[0].mxu0
      %454 = vmatprep.mubr.f32.mxu0 0.0
      %455 = vmatmul.mubr.f32.gmra.mrb[0].mxu0 %v362
      %v456 = vpop.f32.mrb[0].mxu0
      %v457 = vadd.f32 0.0, %v456
      %v458 = vpop.f32.mrb[0].mxu0
      %459 = vmatprep.mubr.f32.mxu0 0.0
      %460 = vmatmul.mubr.f32.gmra.mrb[0].mxu0 %v363
      %v461 = vpop.f32.mrb[0].mxu0
      %v462 = vadd.f32 0.0, %v461
      %v463 = vpop.f32.mrb[0].mxu0
      %464 = vmatprep.mubr.f32.mxu0 0.0
      %465 = vmatmul.mubr.f32.gmra.mrb[0].mxu0 %v364
      %v466 = vpop.f32.mrb[0].mxu0
      %v467 = vadd.f32 0.0, %v466
      %v468 = vpop.f32.mrb[0].mxu0
      %469 = vmatprep.mubr.f32.mxu0 0.0
      %470 = vmatmul.mubr.f32.gmra.mrb[0].mxu0 %v365
      %v471 = vpop.f32.mrb[0].mxu0
      %v472 = vadd.f32 0.0, %v471
      %v473 = vpop.f32.mrb[0].mxu0
      %474 = vmatprep.mubr.f32.mxu0 0.0
      %475 = vmatmul.mubr.f32.gmra.mrb[0].mxu0 %v366
      %v476 = vpop.f32.mrb[0].mxu0
      %v477 = vadd.f32 0.0, %v476
      %v478 = vpop.f32.mrb[0].mxu0
      %479 = vmatprep.mubr.f32.mxu0 0.0
      %480 = vmatmul.mubr.f32.gmra.mrb[0].mxu0 %v367
      %v481 = vpop.f32.mrb[0].mxu0
      %v482 = vadd.f32 0.0, %v481
      %v483 = vpop.f32.mrb[0].mxu0
      %484 = vmatprep.mubr.f32.mxu0 0.0
      %485 = vmatmul.mubr.f32.gmra.mrb[0].mxu0 %v368
      %v486 = vpop.f32.mrb[0].mxu0
      %v487 = vadd.f32 0.0, %v486
      %v488 = vpop.f32.mrb[0].mxu0
      %489 = vdwg.mxu0
      %v490 = vadd.f32 %v353, %v452
      %v491 = vadd.f32 %v354, %v457
      %v492 = vadd.f32 %v355, %v462
      %v493 = vadd.f32 %v356, %v467
      %v494 = vadd.f32 %v357, %v472
      %v495 = vadd.f32 %v358, %v477
      %v496 = vadd.f32 %v359, %v482
      %v497 = vadd.f32 %v360, %v487
      %498 = vst [vmem:[#allocation2] sm:$0xff] %v490
      %499 = vst [vmem:[#allocation2 + $0x8] sm:$0xff] %v491
      %500 = vst [vmem:[#allocation2 + $0x10] sm:$0xff] %v492
      %501 = vst [vmem:[#allocation2 + $0x18] sm:$0xff] %v493
      %502 = vst [vmem:[#allocation2 + $0x20] sm:$0xff] %v494
      %503 = vst [vmem:[#allocation2 + $0x28] sm:$0xff] %v495
      %504 = vst [vmem:[#allocation2 + $0x30] sm:$0xff] %v496
      %505 = vst [vmem:[#allocation2 + $0x38] sm:$0xff] %v497
      // Predicated region
      $region45: #{basic_block_forward.2} parent=39 // pred_check
        %p506 = pneg %p341
      $region46: #{basic_block_forward.2} parent=39 // pred_check_branch
        %508 = sbr.rel (%p506) target = $region48
      $region47: #{basic_block_forward.2} parent=39 // pred_region
        %v509 = vld [vmem:[#allocation2] sm:$0xff]
        %v510 = vld [vmem:[#allocation2 + $0x8] sm:$0xff]
        %v511 = vld [vmem:[#allocation2 + $0x10] sm:$0xff]
        %v512 = vld [vmem:[#allocation2 + $0x18] sm:$0xff]
        %v513 = vld [vmem:[#allocation2 + $0x20] sm:$0xff]
        %v514 = vld [vmem:[#allocation2 + $0x28] sm:$0xff]
        %v515 = vld [vmem:[#allocation2 + $0x30] sm:$0xff]
        %v516 = vld [vmem:[#allocation2 + $0x38] sm:$0xff]
        %v517 = vld [vmem:[%s325] sm:$0x1]
        %v519 = vlaneseq
        %v520 = vshrl.u32 %v519, 7
        %v521 = vsub.s32 0, %v520
        %v522 = vrot.slane %v517, %v521
        %v524 = vmul.f32 %v509, %v522
        %v525 = vmul.f32 %v510, %v522
        %v526 = vmul.f32 %v511, %v522
        %v527 = vmul.f32 %v512, %v522
        %v528 = vmul.f32 %v513, %v522
        %v529 = vmul.f32 %v514, %v522
        %v530 = vmul.f32 %v515, %v522
        %v531 = vmul.f32 %v516, %v522
        %v532 = vld [vmem:[%s328] sm:$0x1]
        %v534 = vlaneseq
        %v535 = vshrl.u32 %v534, 7
        %v536 = vsub.s32 0, %v535
        %v537 = vrot.slane %v532, %v536
        %v539 = vadd.f32 %v524, %v537
        %v540 = vadd.f32 %v525, %v537
        %v541 = vadd.f32 %v526, %v537
        %v542 = vadd.f32 %v527, %v537
        %v543 = vadd.f32 %v528, %v537
        %v544 = vadd.f32 %v529, %v537
        %v545 = vadd.f32 %v530, %v537
        %v546 = vadd.f32 %v531, %v537
        %v547 = vld [vmem:[%s331] sm:$0x1]
        %vm548 = vcmp.gt.f32.partialorder %v547, 0.0
        %v549 = vmax.f32 %v539, 0.0
        %v550 = vmax.f32 %v540, 0.0
        %v551 = vmax.f32 %v541, 0.0
        %v552 = vmax.f32 %v542, 0.0
        %v553 = vmax.f32 %v543, 0.0
        %v554 = vmax.f32 %v544, 0.0
        %v555 = vmax.f32 %v545, 0.0
        %v556 = vmax.f32 %v546, 0.0
        %v557 = vsel %vm548, 1, 0
        %v558 = vlaneseq
        %v559 = vshrl.u32 %v558, 7
        %v560 = vsub.s32 0, %v559
        %v561 = vrot.slane %v557, %v560
        %vm562 = vcmp.eq.s32.totalorder %v561, 1
        %v563 = vsel %vm562, %v549, %v539
        %v564 = vsel %vm562, %v550, %v540
        %v565 = vsel %vm562, %v551, %v541
        %v566 = vsel %vm562, %v552, %v542
        %v567 = vsel %vm562, %v553, %v543
        %v568 = vsel %vm562, %v554, %v544
        %v569 = vsel %vm562, %v555, %v545
        %v570 = vsel %vm562, %v556, %v546
        %571 = vst [vmem:[%s339] sm:$0xff] %v563
        %572 = vst [vmem:[%s339 + $0x8] sm:$0xff] %v564
        %573 = vst [vmem:[%s339 + $0x10] sm:$0xff] %v565
        %574 = vst [vmem:[%s339 + $0x18] sm:$0xff] %v566
        %575 = vst [vmem:[%s339 + $0x20] sm:$0xff] %v567
        %576 = vst [vmem:[%s339 + $0x28] sm:$0xff] %v568
        %577 = vst [vmem:[%s339 + $0x30] sm:$0xff] %v569
        %578 = vst [vmem:[%s339 + $0x38] sm:$0xff] %v570
      $region48: #{basic_block_forward.2} parent=39 // pred_fallthru
        _
      %s579 = smul.u32 8, %s21
      %p580 = scmp.lt.s32.totalorder %s579, 15
      %s581 = scalar_select %p580, %s579, 15
      %p582 = scmp.lt.s32.totalorder %s22, 0
      %s583 = scalar_select %p582, %s22, 0
      %s584 = sadd.s32 %s583, %s581
      %s585 = smul.addr %s584, 8
      %s586 = scalar_lea.vmem %s5, %s585
      // Predicated region
      $region49: #{basic_block_forward.2} parent=39 // pred_check
        %p587 = pneg %p189
      $region50: #{basic_block_forward.2} parent=39 // pred_check_branch
        %589 = sbr.rel (%p587) target = $region52
      $region51: #{basic_block_forward.2} parent=39 // pred_region
        %s590 = smul.u32 8, %s21
      $region52: #{basic_block_forward.2} parent=39 // pred_fallthru
        _
    $region40: #{basic_block_forward.2} parent=5 // pred_fallthru
      _
    %p591 = scmp.le.s32.totalorder 2, %s11
    // Predicated region
    $region53: #{basic_block_forward.2} parent=5 // pred_check
      %p592 = pneg %p591
    $region54: #{basic_block_forward.2} parent=5 // pred_check_branch
      %594 = sbr.rel (%p592) target = $region56
    $region55: #{basic_block_forward.2} parent=5 // pred_region
      %s595 = ssub.s32 %s11, 2
      // Predicated region
      $region57: #{basic_block_forward.2} parent=55 // pred_check
        %p596 = pneg %p195
      $region58: #{basic_block_forward.2} parent=55 // pred_check_branch
        %598 = sbr.rel (%p596) target = $region60
      $region59: #{basic_block_forward.2} parent=55 // pred_region
        %s599 = smul.u32 8, %s24
        %p600 = scmp.lt.s32.totalorder %s599, 15
        %s601 = scalar_select %p600, %s599, 15
        %p602 = scmp.lt.s32.totalorder %s25, 0
        %s603 = scalar_select %p602, %s25, 0
        %s604 = sadd.s32 %s603, %s601
        %s605 = smul.addr %s604, 8
        %s606 = scalar_lea.vmem %s5, %s605
      $region60: #{basic_block_forward.2} parent=55 // pred_fallthru
        _
    $region56: #{basic_block_forward.2} parent=5 // pred_fallthru
      _
  $region6: #{basic_block_forward.2} parent=0 // loop_footer
    %s15 = sadd.s32 1, %s11
  $region7: #{basic_block_forward.2} parent=0 // loop_footer_branch
    %10 = sbr.rel target = $region3
  $region8: #{basic_block_forward.2} parent=0 // loop_exit
    _

// kernel: basic_block_forward.3
$region0: #{basic_block_forward.3}
  #allocation0 [shape = 'u32[]', space=smem, size = 0x4, offset = 0x4, fixed_abs, tag = 'smem constant byte address 0x4 - core index']
  #allocation1 [shape = 'u32[144,128]{1,0:T(1,128)}', space=vmem, size = 0x12000, scoped, tag = 'internal scratch']
  #allocation2 [shape = 'f32[64,128]{1,0:T(8,128)}', space=vmem, size = 0x8000, scoped, tag = 'scratch operand']
  %s0 = inlined_call_operand.vmem [shape: f32[128,128], index: 0, kind: input, shape index: {}]
  %s1 = inlined_call_operand.vmem [shape: f32[128,128], index: 1, kind: input, shape index: {}]
  %s2 = inlined_call_operand.vmem [shape: f32[1,128], index: 2, kind: input, shape index: {}]
  %s3 = inlined_call_operand.vmem [shape: f32[1,128], index: 3, kind: input, shape index: {}]
  %s4 = inlined_call_operand.vmem [shape: f32[128,128], index: 4, kind: input, shape index: {}]
  %s5 = inlined_call_operand.vmem [shape: f32[128,128], index: 5, kind: output, shape index: {}]
  %s6 = sld [smem:[#allocation0]]
  $region61: #{basic_block_forward.3} parent=0
    _
  %s8 = ssub.s32 1, %s6
  %s9 = scalar_select 0, %s8, %s6
  loop: start=0, step=1, limit=4
  $region2: #{basic_block_forward.3} parent=0 // loop_pre_header
    _
  $region3: #{basic_block_forward.3} parent=0 // loop_header
    %s11 = sphi 0, %s15
    %p12 = scmp.ge.s32.totalorder %s11, 4
    %s18 = sphi 0, %s37
    %s19 = sphi 0, %s33
    %s20 = sphi 0, %s29
    %s21 = sphi 0, %s18
    %s22 = sphi 0, %s19
    %s23 = sphi 0, %s20
    %s24 = sphi 0, %s21
    %s25 = sphi 0, %s22
    %s26 = sphi 0, %s23
    %s42 = sphi 0, %s44
    %s45 = sphi 0, %s42
    %s46 = sphi 0, %s45
    %s62 = sphi 0, %s46
    %s70 = sphi 0, %s72
    %s73 = sphi 0, %s70
    %s74 = sphi 0, %s73
    %s90 = sphi 0, %s74
    %s96 = sphi 0, %s98
    %s99 = sphi 0, %s96
    %s100 = sphi 0, %s99
    %s116 = sphi 0, %s100
    %s122 = sphi 0, %s124
    %s125 = sphi 0, %s122
    %s126 = sphi 0, %s125
    %s142 = sphi 0, %s126
    %s150 = sphi 0, %s152
    %s153 = sphi 0, %s150
    %s154 = sphi 0, %s153
    %s170 = sphi 0, %s154
    %s178 = sphi 0, %s180
    %s181 = sphi 0, %s178
    %s182 = sphi 0, %s181
    %s198 = sphi 0, %s182
  $region4: #{basic_block_forward.3} parent=0 // loop_header_branch
    %14 = sbr.rel (%p12) target = $region8
  $region5: #{basic_block_forward.3} parent=0 // loop_body
    %s16 = ssub.s32 %s11, 1
    %s17 = ssub.s32 %s11, 2
    %s27 = sadd.s32 1, %s20
    %p28 = scmp.ge.s32.totalorder %s27, 1
    %s29 = scalar_select %p28, 0, %s27
    %s30 = sadd.s32 1, %s19
    %s31 = scalar_select %p28, %s30, %s19
    %p32 = scmp.ge.s32.totalorder %s31, 1
    %s33 = scalar_select %p32, 0, %s31
    %s34 = sadd.s32 1, %s18
    %s35 = scalar_select %p32, %s34, %s18
    %p36 = scmp.ge.s32.totalorder %s35, 2
    %s37 = scalar_select %p36, 0, %s35
    %s38 = ssub.s32 %s18, %s37
    %s39 = ssub.s32 %s20, %s29
    %s40 = sor.u32 %s38, %s39
    %p41 = scmp.eq.s32.totalorder %s40, 0
    %s43 = sadd.s32 %s42, 1
    %s44 = scalar_select %p41, %s42, %s43
    %p47 = pneg %p41
    %p48 = scmp.eq.s32.totalorder %s11, 1
    %p49 = por %p47, %p48
    %p50 = scmp.ne.s32.totalorder %s42, %s45
    %p51 = scmp.eq.s32.totalorder %s11, 0
    %p52 = por %p50, %p51
    %p53 = scmp.ne.s32.totalorder %s42, %s45
    %p54 = scmp.eq.s32.totalorder %s16, 1
    %p55 = por %p53, %p54
    %p56 = scmp.ne.s32.totalorder %s45, %s46
    %p57 = scmp.eq.s32.totalorder %s16, 0
    %p58 = por %p56, %p57
    %p59 = scmp.ne.s32.totalorder %s45, %s46
    %p60 = scmp.eq.s32.totalorder %s17, 1
    %p61 = por %p59, %p60
    %p63 = scmp.ne.s32.totalorder %s46, %s62
    %p64 = scmp.eq.s32.totalorder %s17, 0
    %p65 = por %p63, %p64
    %s66 = ssub.s32 %s20, %s29
    %s67 = ssub.s32 %s19, %s33
    %s68 = sor.u32 %s66, %s67
    %p69 = scmp.eq.s32.totalorder %s68, 0
    %s71 = sadd.s32 %s70, 1
    %s72 = scalar_select %p69, %s70, %s71
    %p75 = pneg %p69
    %p76 = scmp.eq.s32.totalorder %s11, 1
    %p77 = por %p75, %p76
    %p78 = scmp.ne.s32.totalorder %s70, %s73
    %p79 = scmp.eq.s32.totalorder %s11, 0
    %p80 = por %p78, %p79
    %p81 = scmp.ne.s32.totalorder %s70, %s73
    %p82 = scmp.eq.s32.totalorder %s16, 1
    %p83 = por %p81, %p82
    %p84 = scmp.ne.s32.totalorder %s73, %s74
    %p85 = scmp.eq.s32.totalorder %s16, 0
    %p86 = por %p84, %p85
    %p87 = scmp.ne.s32.totalorder %s73, %s74
    %p88 = scmp.eq.s32.totalorder %s17, 1
    %p89 = por %p87, %p88
    %p91 = scmp.ne.s32.totalorder %s74, %s90
    %p92 = scmp.eq.s32.totalorder %s17, 0
    %p93 = por %p91, %p92
    %s94 = ssub.s32 %s19, %s33
    %p95 = scmp.eq.s32.totalorder %s94, 0
    %s97 = sadd.s32 %s96, 1
    %s98 = scalar_select %p95, %s96, %s97
    %p101 = pneg %p95
    %p102 = scmp.eq.s32.totalorder %s11, 1
    %p103 = por %p101, %p102
    %p104 = scmp.ne.s32.totalorder %s96, %s99
    %p105 = scmp.eq.s32.totalorder %s11, 0
    %p106 = por %p104, %p105
    %p107 = scmp.ne.s32.totalorder %s96, %s99
    %p108 = scmp.eq.s32.totalorder %s16, 1
    %p109 = por %p107, %p108
    %p110 = scmp.ne.s32.totalorder %s99, %s100
    %p111 = scmp.eq.s32.totalorder %s16, 0
    %p112 = por %p110, %p111
    %p113 = scmp.ne.s32.totalorder %s99, %s100
    %p114 = scmp.eq.s32.totalorder %s17, 1
    %p115 = por %p113, %p114
    %p117 = scmp.ne.s32.totalorder %s100, %s116
    %p118 = scmp.eq.s32.totalorder %s17, 0
    %p119 = por %p117, %p118
    %s120 = ssub.s32 %s19, %s33
    %p121 = scmp.eq.s32.totalorder %s120, 0
    %s123 = sadd.s32 %s122, 1
    %s124 = scalar_select %p121, %s122, %s123
    %p127 = pneg %p121
    %p128 = scmp.eq.s32.totalorder %s11, 1
    %p129 = por %p127, %p128
    %p130 = scmp.ne.s32.totalorder %s122, %s125
    %p131 = scmp.eq.s32.totalorder %s11, 0
    %p132 = por %p130, %p131
    %p133 = scmp.ne.s32.totalorder %s122, %s125
    %p134 = scmp.eq.s32.totalorder %s16, 1
    %p135 = por %p133, %p134
    %p136 = scmp.ne.s32.totalorder %s125, %s126
    %p137 = scmp.eq.s32.totalorder %s16, 0
    %p138 = por %p136, %p137
    %p139 = scmp.ne.s32.totalorder %s125, %s126
    %p140 = scmp.eq.s32.totalorder %s17, 1
    %p141 = por %p139, %p140
    %p143 = scmp.ne.s32.totalorder %s126, %s142
    %p144 = scmp.eq.s32.totalorder %s17, 0
    %p145 = por %p143, %p144
    %s146 = ssub.s32 %s18, %s37
    %s147 = ssub.s32 %s19, %s33
    %s148 = sor.u32 %s146, %s147
    %p149 = scmp.eq.s32.totalorder %s148, 0
    %s151 = sadd.s32 %s150, 1
    %s152 = scalar_select %p149, %s150, %s151
    %p155 = pneg %p149
    %p156 = scmp.eq.s32.totalorder %s11, 1
    %p157 = por %p155, %p156
    %p158 = scmp.ne.s32.totalorder %s150, %s153
    %p159 = scmp.eq.s32.totalorder %s11, 0
    %p160 = por %p158, %p159
    %p161 = scmp.ne.s32.totalorder %s150, %s153
    %p162 = scmp.eq.s32.totalorder %s16, 1
    %p163 = por %p161, %p162
    %p164 = scmp.ne.s32.totalorder %s153, %s154
    %p165 = scmp.eq.s32.totalorder %s16, 0
    %p166 = por %p164, %p165
    %p167 = scmp.ne.s32.totalorder %s153, %s154
    %p168 = scmp.eq.s32.totalorder %s17, 1
    %p169 = por %p167, %p168
    %p171 = scmp.ne.s32.totalorder %s154, %s170
    %p172 = scmp.eq.s32.totalorder %s17, 0
    %p173 = por %p171, %p172
    %s174 = ssub.s32 %s18, %s37
    %s175 = ssub.s32 %s19, %s33
    %s176 = sor.u32 %s174, %s175
    %p177 = scmp.eq.s32.totalorder %s176, 0
    %s179 = sadd.s32 %s178, 1
    %s180 = scalar_select %p177, %s178, %s179
    %p183 = pneg %p177
    %p184 = scmp.eq.s32.totalorder %s11, 1
    %p185 = por %p183, %p184
    %p186 = scmp.ne.s32.totalorder %s178, %s181
    %p187 = scmp.eq.s32.totalorder %s11, 0
    %p188 = por %p186, %p187
    %p189 = scmp.ne.s32.totalorder %s178, %s181
    %p190 = scmp.eq.s32.totalorder %s16, 1
    %p191 = por %p189, %p190
    %p192 = scmp.ne.s32.totalorder %s181, %s182
    %p193 = scmp.eq.s32.totalorder %s16, 0
    %p194 = por %p192, %p193
    %p195 = scmp.ne.s32.totalorder %s181, %s182
    %p196 = scmp.eq.s32.totalorder %s17, 1
    %p197 = por %p195, %p196
    %p199 = scmp.ne.s32.totalorder %s182, %s198
    %p200 = scmp.eq.s32.totalorder %s17, 0
    %p201 = por %p199, %p200
    %p202 = scmp.le.s32.totalorder 1, %s11
    %p203 = scmp.lt.s32.totalorder %s11, 3
    %p204 = pnand %p202, %p203
    %p205 = pneg %p204
    // Predicated region
    $region9: #{basic_block_forward.3} parent=5 // pred_check
      _
    $region10: #{basic_block_forward.3} parent=5 // pred_check_branch
      %207 = sbr.rel (%p204) target = $region12
    $region11: #{basic_block_forward.3} parent=5 // pred_region
      %s208 = ssub.s32 %s11, 1
      // Predicated region
      $region13: #{basic_block_forward.3} parent=11 // pred_check
        %p209 = pneg %p86
      $region14: #{basic_block_forward.3} parent=11 // pred_check_branch
        %211 = sbr.rel (%p209) target = $region16
      $region15: #{basic_block_forward.3} parent=11 // pred_region
        %s212 = smul.u32 16, %s23
        %p213 = scmp.lt.s32.totalorder %s212, 15
        %s214 = scalar_select %p213, %s212, 15
        %p215 = scmp.lt.s32.totalorder %s22, 0
        %s216 = scalar_select %p215, %s22, 0
        %s217 = sadd.s32 %s216, %s214
        %s218 = smul.addr %s217, 8
        %s219 = scalar_lea.vmem %s1, %s218
        %s220 = smul.u32 16, %s23
      $region16: #{basic_block_forward.3} parent=11 // pred_fallthru
        _
      // Predicated region
      $region17: #{basic_block_forward.3} parent=11 // pred_check
        %p221 = pneg %p112
      $region18: #{basic_block_forward.3} parent=11 // pred_check_branch
        %223 = sbr.rel (%p221) target = $region20
      $region19: #{basic_block_forward.3} parent=11 // pred_region
        %p224 = scmp.lt.s32.totalorder %s22, 0
        %s225 = scalar_select %p224, %s22, 0
        %s226 = scalar_lea.vmem %s2, %s225
      $region20: #{basic_block_forward.3} parent=11 // pred_fallthru
        _
      // Predicated region
      $region21: #{basic_block_forward.3} parent=11 // pred_check
        %p227 = pneg %p138
      $region22: #{basic_block_forward.3} parent=11 // pred_check_branch
        %229 = sbr.rel (%p227) target = $region24
      $region23: #{basic_block_forward.3} parent=11 // pred_region
        %p230 = scmp.lt.s32.totalorder %s22, 0
        %s231 = scalar_select %p230, %s22, 0
        %s232 = scalar_lea.vmem %s3, %s231
      $region24: #{basic_block_forward.3} parent=11 // pred_fallthru
        _
    $region12: #{basic_block_forward.3} parent=5 // pred_fallthru
      _
    %p233 = scmp.lt.s32.totalorder %s11, 2
    // Predicated region
    $region25: #{basic_block_forward.3} parent=5 // pred_check
      %p234 = pneg %p233
    $region26: #{basic_block_forward.3} parent=5 // pred_check_branch
      %236 = sbr.rel (%p234) target = $region28
    $region27: #{basic_block_forward.3} parent=5 // pred_region
      // Predicated region
      $region29: #{basic_block_forward.3} parent=27 // pred_check
        %p237 = pneg %p52
      $region30: #{basic_block_forward.3} parent=27 // pred_check_branch
        %239 = sbr.rel (%p237) target = $region32
      $region31: #{basic_block_forward.3} parent=27 // pred_region
        %s240 = smul.u32 8, %s18
        %p241 = scmp.lt.s32.totalorder %s240, 15
        %s242 = scalar_select %p241, %s240, 15
        %p243 = scmp.lt.s32.totalorder %s20, 0
        %s244 = scalar_select %p243, %s20, 0
        %s245 = sadd.s32 %s244, %s242
        %s246 = smul.addr %s245, 8
        %s247 = scalar_lea.vmem %s0, %s246
        %s248 = smul.u32 8, %s18
      $region32: #{basic_block_forward.3} parent=27 // pred_fallthru
        _
      // Predicated region
      $region33: #{basic_block_forward.3} parent=27 // pred_check
        %p249 = pneg %p160
      $region34: #{basic_block_forward.3} parent=27 // pred_check_branch
        %251 = sbr.rel (%p249) target = $region36
      $region35: #{basic_block_forward.3} parent=27 // pred_region
        %s252 = smul.u32 8, %s18
        %p253 = scmp.lt.s32.totalorder %s252, 15
        %s254 = scalar_select %p253, %s252, 15
        %p255 = scmp.lt.s32.totalorder %s19, 0
        %s256 = scalar_select %p255, %s19, 0
        %s257 = sadd.s32 %s256, %s254
        %s258 = smul.addr %s257, 8
        %s259 = scalar_lea.vmem %s4, %s258
        %s260 = smul.u32 8, %s18
      $region36: #{basic_block_forward.3} parent=27 // pred_fallthru
        _
    $region28: #{basic_block_forward.3} parent=5 // pred_fallthru
      _
    %p261 = scmp.le.s32.totalorder 1, %s11
    %p262 = scmp.lt.s32.totalorder %s11, 3
    %p263 = pnand %p261, %p262
    %p264 = pneg %p263
    // Predicated region
    $region37: #{basic_block_forward.3} parent=5 // pred_check
      _
    $region38: #{basic_block_forward.3} parent=5 // pred_check_branch
      %266 = sbr.rel (%p263) target = $region40
    $region39: #{basic_block_forward.3} parent=5 // pred_region
      %s267 = ssub.s32 %s11, 1
      %s268 = smul.u32 8, %s21
      %p269 = scmp.lt.s32.totalorder %s268, 15
      %s270 = scalar_select %p269, %s268, 15
      %p271 = scmp.lt.s32.totalorder %s23, 0
      %s272 = scalar_select %p271, %s23, 0
      %s273 = sadd.s32 %s272, %s270
      %s274 = smul.addr %s273, 8
      %s275 = scalar_lea.vmem %s0, %s274
      %p276 = pneg %p58
      %p277 = pneg %p55
      %s278 = smul.u32 16, %s23
      %p279 = scmp.lt.s32.totalorder %s278, 15
      %s280 = scalar_select %p279, %s278, 15
      %p281 = scmp.lt.s32.totalorder %s22, 0
      %s282 = scalar_select %p281, %s22, 0
      %s283 = sadd.s32 %s282, %s280
      %s284 = smul.addr %s283, 8
      %s285 = scalar_lea.vmem %s1, %s284
      %p286 = pneg %p86
      %p287 = pneg %p83
      %p288 = scmp.lt.s32.totalorder %s22, 0
      %s289 = scalar_select %p288, %s22, 0
      %s290 = scalar_lea.vmem %s2, %s289
      %p291 = pneg %p112
      %p292 = pneg %p109
      %p293 = scmp.lt.s32.totalorder %s22, 0
      %s294 = scalar_select %p293, %s22, 0
      %s295 = scalar_lea.vmem %s3, %s294
      %p296 = pneg %p138
      %p297 = pneg %p135
      %s298 = smul.u32 8, %s21
      %p299 = scmp.lt.s32.totalorder %s298, 15
      %s300 = scalar_select %p299, %s298, 15
      %p301 = scmp.lt.s32.totalorder %s22, 0
      %s302 = scalar_select %p301, %s22, 0
      %s303 = sadd.s32 %s302, %s300
      %s304 = smul.addr %s303, 8
      %s305 = scalar_lea.vmem %s4, %s304
      %p306 = pneg %p166
      %p307 = pneg %p163
      %p308 = pneg %p194
      %p309 = pneg %p191
      %s310 = smul.u32 8, %s21
      %p311 = scmp.lt.s32.totalorder %s310, 15
      %s312 = scalar_select %p311, %s310, 15
      %p313 = scmp.lt.s32.totalorder %s22, 0
      %s314 = scalar_select %p313, %s22, 0
      %s315 = sadd.s32 %s314, %s312
      %s316 = smul.addr %s315, 8
      %s317 = scalar_lea.vmem %s5, %s316
      %s318 = smul.u32 8, %s21
      %p319 = scmp.lt.s32.totalorder %s318, 15
      %s320 = scalar_select %p319, %s318, 15
      %p321 = scmp.lt.s32.totalorder %s23, 0
      %s322 = scalar_select %p321, %s23, 0
      %s323 = sadd.s32 %s322, %s320
      %s324 = smul.addr %s323, 8
      %s325 = scalar_lea.vmem %s0, %s324
      %s326 = smul.u32 8, %s21
      %s327 = smul.u32 16, %s23
      %p328 = scmp.lt.s32.totalorder %s327, 15
      %s329 = scalar_select %p328, %s327, 15
      %p330 = scmp.lt.s32.totalorder %s22, 0
      %s331 = scalar_select %p330, %s22, 0
      %s332 = sadd.s32 %s331, %s329
      %s333 = smul.addr %s332, 8
      %s334 = scalar_lea.vmem %s1, %s333
      %s335 = smul.u32 16, %s23
      %p336 = scmp.lt.s32.totalorder %s22, 0
      %s337 = scalar_select %p336, %s22, 0
      %s338 = scalar_lea.vmem %s2, %s337
      %p339 = scmp.lt.s32.totalorder %s22, 0
      %s340 = scalar_select %p339, %s22, 0
      %s341 = scalar_lea.vmem %s3, %s340
      %s342 = smul.u32 8, %s21
      %p343 = scmp.lt.s32.totalorder %s342, 15
      %s344 = scalar_select %p343, %s342, 15
      %p345 = scmp.lt.s32.totalorder %s22, 0
      %s346 = scalar_select %p345, %s22, 0
      %s347 = sadd.s32 %s346, %s344
      %s348 = smul.addr %s347, 8
      %s349 = scalar_lea.vmem %s4, %s348
      %s350 = smul.u32 8, %s21
      %s351 = smul.u32 8, %s21
      %p352 = scmp.lt.s32.totalorder %s351, 15
      %s353 = scalar_select %p352, %s351, 15
      %p354 = scmp.lt.s32.totalorder %s22, 0
      %s355 = scalar_select %p354, %s22, 0
      %s356 = sadd.s32 %s355, %s353
      %s357 = smul.addr %s356, 8
      %s358 = scalar_lea.vmem %s5, %s357
      %s359 = smul.u32 8, %s21
      %p360 = scmp.eq.s32.totalorder %s23, 0
      // Predicated region
      $region41: #{basic_block_forward.3} parent=39 // pred_check
        %p361 = pneg %p360
      $region42: #{basic_block_forward.3} parent=39 // pred_check_branch
        %363 = sbr.rel (%p361) target = $region44
      $region43: #{basic_block_forward.3} parent=39 // pred_region
        %364 = vst [vmem:[#allocation2] sm:$0xff] 0.0
        %365 = vst [vmem:[#allocation2 + $0x8] sm:$0xff] 0.0
        %366 = vst [vmem:[#allocation2 + $0x10] sm:$0xff] 0.0
        %367 = vst [vmem:[#allocation2 + $0x18] sm:$0xff] 0.0
        %368 = vst [vmem:[#allocation2 + $0x20] sm:$0xff] 0.0
        %369 = vst [vmem:[#allocation2 + $0x28] sm:$0xff] 0.0
        %370 = vst [vmem:[#allocation2 + $0x30] sm:$0xff] 0.0
        %371 = vst [vmem:[#allocation2 + $0x38] sm:$0xff] 0.0
      $region44: #{basic_block_forward.3} parent=39 // pred_fallthru
        _
      %v372 = vld [vmem:[#allocation2] sm:$0xff]
      %v373 = vld [vmem:[#allocation2 + $0x8] sm:$0xff]
      %v374 = vld [vmem:[#allocation2 + $0x10] sm:$0xff]
      %v375 = vld [vmem:[#allocation2 + $0x18] sm:$0xff]
      %v376 = vld [vmem:[#allocation2 + $0x20] sm:$0xff]
      %v377 = vld [vmem:[#allocation2 + $0x28] sm:$0xff]
      %v378 = vld [vmem:[#allocation2 + $0x30] sm:$0xff]
      %v379 = vld [vmem:[#allocation2 + $0x38] sm:$0xff]
      %v380 = vld [vmem:[%s325] sm:$0xff]
      %v381 = vld [vmem:[%s325 + $0x8] sm:$0xff]
      %v382 = vld [vmem:[%s325 + $0x10] sm:$0xff]
      %v383 = vld [vmem:[%s325 + $0x18] sm:$0xff]
      %v384 = vld [vmem:[%s325 + $0x20] sm:$0xff]
      %v385 = vld [vmem:[%s325 + $0x28] sm:$0xff]
      %v386 = vld [vmem:[%s325 + $0x30] sm:$0xff]
      %v387 = vld [vmem:[%s325 + $0x38] sm:$0xff]
      %v388 = vld [vmem:[%s334] sm:$0xff]
      %v389 = vld [vmem:[%s334 + $0x8] sm:$0xff]
      %v390 = vld [vmem:[%s334 + $0x10] sm:$0xff]
      %v391 = vld [vmem:[%s334 + $0x18] sm:$0xff]
      %v392 = vld [vmem:[%s334 + $0x20] sm:$0xff]
      %v393 = vld [vmem:[%s334 + $0x28] sm:$0xff]
      %v394 = vld [vmem:[%s334 + $0x30] sm:$0xff]
      %v395 = vld [vmem:[%s334 + $0x38] sm:$0xff]
      %v396 = vld [vmem:[%s334 + $0x40] sm:$0xff]
      %v397 = vld [vmem:[%s334 + $0x48] sm:$0xff]
      %v398 = vld [vmem:[%s334 + $0x50] sm:$0xff]
      %v399 = vld [vmem:[%s334 + $0x58] sm:$0xff]
      %v400 = vld [vmem:[%s334 + $0x60] sm:$0xff]
      %v401 = vld [vmem:[%s334 + $0x68] sm:$0xff]
      %v402 = vld [vmem:[%s334 + $0x70] sm:$0xff]
      %v403 = vld [vmem:[%s334 + $0x78] sm:$0xff]
      %404 = vmatprep.subr.mxu0 0.0
      %405 = vmatpush1.msra.mxu0 %v388
      %406 = vmatprep.subr.mxu0 0.0
      %407 = vmatpush1.msra.mxu0 %v389
      %408 = vmatprep.subr.mxu0 0.0
      %409 = vmatpush1.msra.mxu0 %v390
      %410 = vmatprep.subr.mxu0 0.0
      %411 = vmatpush1.msra.mxu0 %v391
      %412 = vmatprep.subr.mxu0 0.0
      %413 = vmatpush1.msra.mxu0 %v392
      %414 = vmatprep.subr.mxu0 0.0
      %415 = vmatpush1.msra.mxu0 %v393
      %416 = vmatprep.subr.mxu0 0.0
      %417 = vmatpush1.msra.mxu0 %v394
      %418 = vmatprep.subr.mxu0 0.0
      %419 = vmatpush1.msra.mxu0 %v395
      %420 = vmatprep.subr.mxu0 0.0
      %421 = vmatpush1.msra.mxu0 %v396
      %422 = vmatprep.subr.mxu0 0.0
      %423 = vmatpush1.msra.mxu0 %v397
      %424 = vmatprep.subr.mxu0 0.0
      %425 = vmatpush1.msra.mxu0 %v398
      %426 = vmatprep.subr.mxu0 0.0
      %427 = vmatpush1.msra.mxu0 %v399
      %428 = vmatprep.subr.mxu0 0.0
      %429 = vmatpush1.msra.mxu0 %v400
      %430 = vmatprep.subr.mxu0 0.0
      %431 = vmatpush1.msra.mxu0 %v401
      %432 = vmatprep.subr.mxu0 0.0
      %433 = vmatpush1.msra.mxu0 %v402
      %434 = vmatprep.subr.mxu0 0.0
      %435 = vmatpush1.msra.mxu0 %v403
      %436 = vmatprep.subr.mxu0 0.0
      %437 = vmatpush1.msra.mxu0 0.0
      %438 = vmatprep.subr.mxu0 0.0
      %439 = vmatpush1.msra.mxu0 0.0
      %440 = vmatprep.subr.mxu0 0.0
      %441 = vmatpush1.msra.mxu0 0.0
      %442 = vmatprep.subr.mxu0 0.0
      %443 = vmatpush1.msra.mxu0 0.0
      %444 = vmatprep.subr.mxu0 0.0
      %445 = vmatpush1.msra.mxu0 0.0
      %446 = vmatprep.subr.mxu0 0.0
      %447 = vmatpush1.msra.mxu0 0.0
      %448 = vmatprep.subr.mxu0 0.0
      %449 = vmatpush1.msra.mxu0 0.0
      %450 = vmatprep.subr.mxu0 0.0
      %451 = vmatpush1.msra.mxu0 0.0
      %452 = vmatprep.subr.mxu0 0.0
      %453 = vmatpush1.msra.mxu0 0.0
      %454 = vmatprep.subr.mxu0 0.0
      %455 = vmatpush1.msra.mxu0 0.0
      %456 = vmatprep.subr.mxu0 0.0
      %457 = vmatpush1.msra.mxu0 0.0
      %458 = vmatprep.subr.mxu0 0.0
      %459 = vmatpush1.msra.mxu0 0.0
      %460 = vmatprep.subr.mxu0 0.0
      %461 = vmatpush1.msra.mxu0 0.0
      %462 = vmatprep.subr.mxu0 0.0
      %463 = vmatpush1.msra.mxu0 0.0
      %464 = vmatprep.subr.mxu0 0.0
      %465 = vmatpush1.msra.mxu0 0.0
      %466 = vmatprep.subr.mxu0 0.0
      %467 = vmatpush1.msra.mxu0 0.0
      %468 = vmatprep.mubr.f32.mxu0 0.0
      %469 = vmatmul.mubr.f32.gmra.mrb[0].mxu0 %v380
      %v470 = vpop.f32.mrb[0].mxu0
      %v471 = vadd.f32 0.0, %v470
      %v472 = vpop.f32.mrb[0].mxu0
      %473 = vmatprep.mubr.f32.mxu0 0.0
      %474 = vmatmul.mubr.f32.gmra.mrb[0].mxu0 %v381
      %v475 = vpop.f32.mrb[0].mxu0
      %v476 = vadd.f32 0.0, %v475
      %v477 = vpop.f32.mrb[0].mxu0
      %478 = vmatprep.mubr.f32.mxu0 0.0
      %479 = vmatmul.mubr.f32.gmra.mrb[0].mxu0 %v382
      %v480 = vpop.f32.mrb[0].mxu0
      %v481 = vadd.f32 0.0, %v480
      %v482 = vpop.f32.mrb[0].mxu0
      %483 = vmatprep.mubr.f32.mxu0 0.0
      %484 = vmatmul.mubr.f32.gmra.mrb[0].mxu0 %v383
      %v485 = vpop.f32.mrb[0].mxu0
      %v486 = vadd.f32 0.0, %v485
      %v487 = vpop.f32.mrb[0].mxu0
      %488 = vmatprep.mubr.f32.mxu0 0.0
      %489 = vmatmul.mubr.f32.gmra.mrb[0].mxu0 %v384
      %v490 = vpop.f32.mrb[0].mxu0
      %v491 = vadd.f32 0.0, %v490
      %v492 = vpop.f32.mrb[0].mxu0
      %493 = vmatprep.mubr.f32.mxu0 0.0
      %494 = vmatmul.mubr.f32.gmra.mrb[0].mxu0 %v385
      %v495 = vpop.f32.mrb[0].mxu0
      %v496 = vadd.f32 0.0, %v495
      %v497 = vpop.f32.mrb[0].mxu0
      %498 = vmatprep.mubr.f32.mxu0 0.0
      %499 = vmatmul.mubr.f32.gmra.mrb[0].mxu0 %v386
      %v500 = vpop.f32.mrb[0].mxu0
      %v501 = vadd.f32 0.0, %v500
      %v502 = vpop.f32.mrb[0].mxu0
      %503 = vmatprep.mubr.f32.mxu0 0.0
      %504 = vmatmul.mubr.f32.gmra.mrb[0].mxu0 %v387
      %v505 = vpop.f32.mrb[0].mxu0
      %v506 = vadd.f32 0.0, %v505
      %v507 = vpop.f32.mrb[0].mxu0
      %508 = vdwg.mxu0
      %v509 = vadd.f32 %v372, %v471
      %v510 = vadd.f32 %v373, %v476
      %v511 = vadd.f32 %v374, %v481
      %v512 = vadd.f32 %v375, %v486
      %v513 = vadd.f32 %v376, %v491
      %v514 = vadd.f32 %v377, %v496
      %v515 = vadd.f32 %v378, %v501
      %v516 = vadd.f32 %v379, %v506
      %517 = vst [vmem:[#allocation2] sm:$0xff] %v509
      %518 = vst [vmem:[#allocation2 + $0x8] sm:$0xff] %v510
      %519 = vst [vmem:[#allocation2 + $0x10] sm:$0xff] %v511
      %520 = vst [vmem:[#allocation2 + $0x18] sm:$0xff] %v512
      %521 = vst [vmem:[#allocation2 + $0x20] sm:$0xff] %v513
      %522 = vst [vmem:[#allocation2 + $0x28] sm:$0xff] %v514
      %523 = vst [vmem:[#allocation2 + $0x30] sm:$0xff] %v515
      %524 = vst [vmem:[#allocation2 + $0x38] sm:$0xff] %v516
      // Predicated region
      $region45: #{basic_block_forward.3} parent=39 // pred_check
        %p525 = pneg %p360
      $region46: #{basic_block_forward.3} parent=39 // pred_check_branch
        %527 = sbr.rel (%p525) target = $region48
      $region47: #{basic_block_forward.3} parent=39 // pred_region
        %v528 = vld [vmem:[#allocation2] sm:$0xff]
        %v529 = vld [vmem:[#allocation2 + $0x8] sm:$0xff]
        %v530 = vld [vmem:[#allocation2 + $0x10] sm:$0xff]
        %v531 = vld [vmem:[#allocation2 + $0x18] sm:$0xff]
        %v532 = vld [vmem:[#allocation2 + $0x20] sm:$0xff]
        %v533 = vld [vmem:[#allocation2 + $0x28] sm:$0xff]
        %v534 = vld [vmem:[#allocation2 + $0x30] sm:$0xff]
        %v535 = vld [vmem:[#allocation2 + $0x38] sm:$0xff]
        %v536 = vld [vmem:[%s338] sm:$0x1]
        %v538 = vlaneseq
        %v539 = vshrl.u32 %v538, 7
        %v540 = vsub.s32 0, %v539
        %v541 = vrot.slane %v536, %v540
        %v543 = vmul.f32 %v528, %v541
        %v544 = vmul.f32 %v529, %v541
        %v545 = vmul.f32 %v530, %v541
        %v546 = vmul.f32 %v531, %v541
        %v547 = vmul.f32 %v532, %v541
        %v548 = vmul.f32 %v533, %v541
        %v549 = vmul.f32 %v534, %v541
        %v550 = vmul.f32 %v535, %v541
        %v551 = vld [vmem:[%s341] sm:$0x1]
        %v553 = vlaneseq
        %v554 = vshrl.u32 %v553, 7
        %v555 = vsub.s32 0, %v554
        %v556 = vrot.slane %v551, %v555
        %v558 = vadd.f32 %v543, %v556
        %v559 = vadd.f32 %v544, %v556
        %v560 = vadd.f32 %v545, %v556
        %v561 = vadd.f32 %v546, %v556
        %v562 = vadd.f32 %v547, %v556
        %v563 = vadd.f32 %v548, %v556
        %v564 = vadd.f32 %v549, %v556
        %v565 = vadd.f32 %v550, %v556
        %v566 = vld [vmem:[%s349] sm:$0xff]
        %v567 = vld [vmem:[%s349 + $0x8] sm:$0xff]
        %v568 = vld [vmem:[%s349 + $0x10] sm:$0xff]
        %v569 = vld [vmem:[%s349 + $0x18] sm:$0xff]
        %v570 = vld [vmem:[%s349 + $0x20] sm:$0xff]
        %v571 = vld [vmem:[%s349 + $0x28] sm:$0xff]
        %v572 = vld [vmem:[%s349 + $0x30] sm:$0xff]
        %v573 = vld [vmem:[%s349 + $0x38] sm:$0xff]
        %v574 = vadd.f32 %v558, %v566
        %v575 = vadd.f32 %v559, %v567
        %v576 = vadd.f32 %v560, %v568
        %v577 = vadd.f32 %v561, %v569
        %v578 = vadd.f32 %v562, %v570
        %v579 = vadd.f32 %v563, %v571
        %v580 = vadd.f32 %v564, %v572
        %v581 = vadd.f32 %v565, %v573
        %582 = vst [vmem:[%s358] sm:$0xff] %v574
        %583 = vst [vmem:[%s358 + $0x8] sm:$0xff] %v575
        %584 = vst [vmem:[%s358 + $0x10] sm:$0xff] %v576
        %585 = vst [vmem:[%s358 + $0x18] sm:$0xff] %v577
        %586 = vst [vmem:[%s358 + $0x20] sm:$0xff] %v578
        %587 = vst [vmem:[%s358 + $0x28] sm:$0xff] %v579
        %588 = vst [vmem:[%s358 + $0x30] sm:$0xff] %v580
        %589 = vst [vmem:[%s358 + $0x38] sm:$0xff] %v581
      $region48: #{basic_block_forward.3} parent=39 // pred_fallthru
        _
      %s590 = smul.u32 8, %s21
      %p591 = scmp.lt.s32.totalorder %s590, 15
      %s592 = scalar_select %p591, %s590, 15
      %p593 = scmp.lt.s32.totalorder %s22, 0
      %s594 = scalar_select %p593, %s22, 0
      %s595 = sadd.s32 %s594, %s592
      %s596 = smul.addr %s595, 8
      %s597 = scalar_lea.vmem %s5, %s596
      // Predicated region
      $region49: #{basic_block_forward.3} parent=39 // pred_check
        %p598 = pneg %p191
      $region50: #{basic_block_forward.3} parent=39 // pred_check_branch
        %600 = sbr.rel (%p598) target = $region52
      $region51: #{basic_block_forward.3} parent=39 // pred_region
        %s601 = smul.u32 8, %s21
      $region52: #{basic_block_forward.3} parent=39 // pred_fallthru
        _
    $region40: #{basic_block_forward.3} parent=5 // pred_fallthru
      _
    %p602 = scmp.le.s32.totalorder 2, %s11
    // Predicated region
    $region53: #{basic_block_forward.3} parent=5 // pred_check
      %p603 = pneg %p602
    $region54: #{basic_block_forward.3} parent=5 // pred_check_branch
      %605 = sbr.rel (%p603) target = $region56
    $region55: #{basic_block_forward.3} parent=5 // pred_region
      %s606 = ssub.s32 %s11, 2
      // Predicated region
      $region57: #{basic_block_forward.3} parent=55 // pred_check
        %p607 = pneg %p197
      $region58: #{basic_block_forward.3} parent=55 // pred_check_branch
        %609 = sbr.rel (%p607) target = $region60
      $region59: #{basic_block_forward.3} parent=55 // pred_region
        %s610 = smul.u32 8, %s24
        %p611 = scmp.lt.s32.totalorder %s610, 15
        %s612 = scalar_select %p611, %s610, 15
        %p613 = scmp.lt.s32.totalorder %s25, 0
        %s614 = scalar_select %p613, %s25, 0
        %s615 = sadd.s32 %s614, %s612
        %s616 = smul.addr %s615, 8
        %s617 = scalar_lea.vmem %s5, %s616
      $region60: #{basic_block_forward.3} parent=55 // pred_fallthru
        _
    $region56: #{basic_block_forward.3} parent=5 // pred_fallthru
      _
  $region6: #{basic_block_forward.3} parent=0 // loop_footer
    %s15 = sadd.s32 1, %s11
  $region7: #{basic_block_forward.3} parent=0 // loop_footer_branch
    %10 = sbr.rel target = $region3
  $region8: #{basic_block_forward.3} parent=0 // loop_exit
    _

</llo_original>
